<compile_context>
chip_gen: v6e
topology: v6e:2x2x1
jax: 0.10.0
libtpu: 0.0.40
codegen_flags: <defaults>
</compile_context>

<pallas_src>
import numpy as np
import jax
import jax.numpy as jnp
from jax.experimental import pallas as pl
from jax.experimental.pallas import tpu as pltpu

NEG_SLOPE = 0.2
BN_EPS = 1e-5
LANE = 128


class Params:
    img_sz = 16
    img_fm = 4
    init_fm = 8
    max_fm = 32
    hid_dim = 32
    n_attr = 4


# ------------------------------ fused kernel -------------------------------

def _make_kernel(meta, n_layers, n_attr):
    """Refs: a0 (R0,128) f32, rw (n_layers+1,128,512) bf16, lh (n_layers,24,32) bf16,
             f32m (2*(n_layers+1)+n_bn, 24, 128) f32, gnw (2*n_bn,128,128) f32, out (B,n_attr)."""

    def kernel(a0_ref, rw_ref, lh_ref, f32m_ref, gnw_ref, out_ref):
        a = a0_ref[...]                                            # f32 (R_in0, 128)
        for i, m in enumerate(meta):
            B, S, r_out = m["B"], m["S"], m["R_out"]
            # conv(4,2,1):  T = A @ RW_cat,  acc = sum_kh sublane-shift(T_kh, kh*B)
            t = jnp.dot(a.astype(jnp.bfloat16), rw_ref[i],
                        preferred_element_type=jnp.float32)        # (R_in, 512) f32
            acc = (t[0:S, 0:LANE]
                   + t[B:B + S, LANE:2 * LANE]
                   + t[2 * B:2 * B + S, 2 * LANE:3 * LANE]
                   + t[3 * B:3 * B + S, 3 * LANE:4 * LANE])        # (S, 128) f32
            if m["last"]:
                pre = acc[0:B, :]                                  # LH_0 == [I_B | 0]
            else:
                lh = lh_ref[i][0:r_out, 0:S]                       # bf16 0/1 row selector
                pre = jnp.dot(lh, acc.astype(jnp.bfloat16),
                              preferred_element_type=jnp.float32)  # (R_out, 128)
            pre = pre + f32m_ref[2 * i][0:r_out, :]                # + bias (zero on pad)
            if m["has_bn"]:
                j = m["bn_idx"]
                gn, gnt = gnw_ref[2 * j], gnw_ref[2 * j + 1]
                # training-mode batch stats; padded border contributes exact zeros
                s1 = jnp.sum(pre, axis=0, keepdims=True)
                s2 = jnp.sum(pre * pre, axis=0, keepdims=True)
                s12 = jnp.concatenate([s1, s2], axis=0)            # (2, 128) f32
                stats = jnp.dot(s12, gn,
                                preferred_element_type=jnp.float32) * m["inv_count"]
                mean = stats[0:1, :]
                var = stats[1:2, :] - mean * mean                  # biased variance
                inv = jax.lax.rsqrt(var + BN_EPS)
                gb = f32m_ref[m["gb_idx"]][0:2, :]                 # row0 gamma, row1 beta
                scale = gb[0:1, :] * inv
                shift = gb[1:2, :] - mean * scale
                ss = jnp.concatenate([scale, shift], axis=0)       # (2, 128)
                ssl = jnp.dot(ss, gnt, preferred_element_type=jnp.float32)
                y = pre * ssl[0:1, :] + ssl[1:2, :]
                y = jnp.where(y >= 0.0, y, NEG_SLOPE * y)          # LeakyReLU(0.2)
                a = y * f32m_ref[2 * i + 1][0:r_out, :]            # re-zero pad border
            else:
                a = jnp.where(pre >= 0.0, pre, NEG_SLOPE * pre)
        # classifier head: Linear -> LeakyReLU -> Linear
        rwh = rw_ref[n_layers]                                     # (128, 512) bf16
        b1 = f32m_ref[2 * n_layers][0:1, :]
        b2 = f32m_ref[2 * n_layers + 1][0:1, :]
        h = jnp.dot(a.astype(jnp.bfloat16), rwh[:, 0:LANE],
                    preferred_element_type=jnp.float32) + b1
        h = jnp.where(h >= 0.0, h, NEG_SLOPE * h)
        o = jnp.dot(h.astype(jnp.bfloat16), rwh[:, LANE:2 * LANE],
                    preferred_element_type=jnp.float32) + b2
        out_ref[...] = o[:, 0:n_attr]

    return kernel


# --------------------- packed structured constants (init) -------------------

def init_params(p, batch, seed=0):
    n_layers = int(np.log2(p.img_sz))
    conv_out_fm = min(p.init_fm * 2 ** (n_layers - 1), p.max_fm)
    n_bn = n_layers - 1
    rng = np.random.RandomState(seed)

    chans = []
    cin, cout = p.img_fm, p.init_fm
    for _ in range(n_layers):
        chans.append((cin, cout))
        cin, cout = cout, min(2 * cout, p.max_fm)
    assert chans[-1][1] == conv_out_fm

    RW = np.zeros((n_layers + 1, LANE, 4 * LANE), np.float32)      # hstacked RW_cat + head W1/W2
    LH = np.zeros((n_layers, 24, 32), np.float32)                  # LH_0 row selectors
    F32M = np.zeros((2 * (n_layers + 1) + n_bn, 24, LANE), np.float32)  # bias/mask/b1/b2/gamma-beta
    GNW = np.zeros((2 * n_bn, LANE, LANE), np.float32)             # GN / GN^T per BN layer

    meta = []
    H = p.img_sz
    for i, (cin, cout) in enumerate(chans):
        last = (i == n_layers - 1)
        H_out = H // 2
        Hp_in = H + 2
        Hp_out = H_out if last else H_out + 2
        off = 0 if last else 1
        R_out = Hp_out * batch
        S = (H - 1) * batch
        assert Hp_in * cin <= LANE and Hp_out * cout <= LANE
        assert R_out <= 24 and S <= 32

        w = (0.05 * rng.randn(cout, cin, 4, 4)).astype(np.float32)   # (Cout, Cin, kh, kw)
        b = (0.05 * rng.randn(cout)).astype(np.float32)

        for kh in range(4):                                          # RW_cat (kh blocks hstacked)
            for wo in range(H_out):
                for kw in range(4):
                    wi = 2 * wo + kw                                  # padded input col
                    r0 = wi * cin
                    c0 = kh * LANE + (wo + off) * cout
                    RW[i, r0:r0 + cin, c0:c0 + cout] = w[:, :, kh, kw].T
        for ho in range(H_out):                                       # LH_0
            for bb in range(batch):
                LH[i, (ho + off) * batch + bb, 2 * ho * batch + bb] = 1.0
        for ho in range(H_out):                                       # bias map + real-pixel mask
            for bb in range(batch):
                r = (ho + off) * batch + bb
                for wo in range(H_out):
                    c0 = (wo + off) * cout
                    F32M[2 * i, r, c0:c0 + cout] = b
                    F32M[2 * i + 1, r, c0:c0 + cout] = 1.0
        lm = dict(B=batch, S=S, R_out=R_out, last=last,
                  has_bn=(i > 0), bn_idx=i - 1,
                  gb_idx=2 * (n_layers + 1) + (i - 1),
                  inv_count=1.0 / (batch * H_out * H_out))
        if i > 0:                                                     # BatchNorm2d(affine=True)
            j = i - 1
            gamma = (1.0 + 0.05 * rng.randn(cout)).astype(np.float32)
            beta = (0.05 * rng.randn(cout)).astype(np.float32)
            F32M[2 * (n_layers + 1) + j, 0, :cout] = gamma
            F32M[2 * (n_layers + 1) + j, 1, :cout] = beta
            for wo in range(H_out):                                   # channel-grouping selector
                c0 = (wo + off) * cout
                GNW[2 * j, c0:c0 + cout, :cout] = np.eye(cout, dtype=np.float32)
            GNW[2 * j + 1] = GNW[2 * j].T
        meta.append(lm)
        H = H_out

    # classifier head packed into RW slot n_layers (kh block 0 -> W1, block 1 -> W2)
    w1 = (0.05 * rng.randn(conv_out_fm, p.hid_dim)).astype(np.float32)
    b1 = (0.05 * rng.randn(p.hid_dim)).astype(np.float32)
    w2 = (0.05 * rng.randn(p.hid_dim, p.n_attr)).astype(np.float32)
    b2 = (0.05 * rng.randn(p.n_attr)).astype(np.float32)
    RW[n_layers, :conv_out_fm, 0:p.hid_dim] = w1
    RW[n_layers, :p.hid_dim, LANE:LANE + p.n_attr] = w2
    F32M[2 * n_layers, 0, :p.hid_dim] = b1
    F32M[2 * n_layers + 1, 0, :p.n_attr] = b2

    consts = (jnp.asarray(RW, dtype=jnp.bfloat16),
              jnp.asarray(LH, dtype=jnp.bfloat16),
              jnp.asarray(F32M, dtype=jnp.float32),
              jnp.asarray(GNW, dtype=jnp.float32))
    return dict(consts=consts, meta=tuple(meta), n_layers=n_layers,
                batch=batch, img_sz=p.img_sz, img_fm=p.img_fm, n_attr=p.n_attr)


# --------------------------------- wrapper ----------------------------------

def make_forward(params):
    meta, n_layers = params["meta"], params["n_layers"]
    B, n_attr = params["batch"], params["n_attr"]
    C, Hp = params["img_fm"], params["img_sz"] + 2
    kernel = _make_kernel(meta, n_layers, n_attr)

    vmem = pl.BlockSpec(memory_space=pltpu.MemorySpace.VMEM)
    call = pl.pallas_call(
        kernel,
        out_shape=jax.ShapeDtypeStruct((B, n_attr), jnp.float32),
        in_specs=[vmem] * 5,
        out_specs=vmem,
    )
    consts = params["consts"]

    @jax.jit
    def forward(x_nchw):
        # tiny input re-layout: zero-pad spatially, pack into A0[(h*B+b),(w*C+c)], lane-pad to 128
        xp = jnp.pad(x_nchw.astype(jnp.float32), ((0, 0), (0, 0), (1, 1), (1, 1)))
        a0 = jnp.transpose(xp, (2, 0, 3, 1)).reshape(Hp * B, Hp * C)
        a0 = jnp.pad(a0, ((0, 0), (0, LANE - Hp * C)))
        return call(a0, *consts)

    return forward


# ----------------------------------- main ------------------------------------

if __name__ == "__main__":
    p = Params()
    B = 2
    params = init_params(p, batch=B, seed=0)
    x = jax.random.normal(jax.random.PRNGKey(0),
                          (B, p.img_fm, p.img_sz, p.img_sz), jnp.float32)   # NCHW
    forward = make_forward(params)
    out = jax.block_until_ready(forward(x))
    assert out.shape == (B, p.n_attr) and out.dtype == jnp.float32
    assert bool(jnp.all(jnp.isfinite(out)))
    print("KERNEL_OK")
</pallas_src>

<mosaic_0001>
module attributes {stable_mosaic.version = 11 : i64} {
  func.func @kernel(%arg0: memref<36x128xf32, #tpu.memory_space<vmem>>, %arg1: memref<5x128x512xbf16, #tpu.memory_space<vmem>>, %arg2: memref<4x24x32xbf16, #tpu.memory_space<vmem>>, %arg3: memref<13x24x128xf32, #tpu.memory_space<vmem>>, %arg4: memref<6x128x128xf32, #tpu.memory_space<vmem>>, %arg5: memref<2x4xf32, #tpu.memory_space<vmem>>) attributes {dimension_semantics = [], scalar_prefetch = 0 : i64, scratch_operands = 0 : i64, tpu.core_type = #tpu.core_type<tc>} {
    %c0 = arith.constant 0 : index
    %c0_0 = arith.constant 0 : index
    %0 = vector.load %arg0[%c0, %c0_0] : memref<36x128xf32, #tpu.memory_space<vmem>>, vector<36x128xf32>
    %1 = arith.truncf %0 : vector<36x128xf32> to vector<36x128xbf16>
    %c0_1 = arith.constant 0 : index
    %c0_2 = arith.constant 0 : index
    %c0_3 = arith.constant 0 : index
    %2 = vector.load %arg1[%c0_1, %c0_2, %c0_3] : memref<5x128x512xbf16, #tpu.memory_space<vmem>>, vector<1x128x512xbf16>
    %3 = vector.shape_cast %2 : vector<1x128x512xbf16> to vector<128x512xbf16>
    %cst = arith.constant dense<0.000000e+00> : vector<36x512xf32>
    %4 = tpu.matmul %1, %3, %cst {dimension_numbers = #tpu.dot_dimension_numbers<[1], [0], [0], [1], [0, 0, 1, 1], [], []>} : vector<36x128xbf16>, vector<128x512xbf16>, vector<36x512xf32> -> vector<36x512xf32>
    %5 = vector.extract_strided_slice %4 {offsets = [0, 0], sizes = [30, 128], strides = [1, 1]} : vector<36x512xf32> to vector<30x128xf32>
    %6 = vector.extract_strided_slice %4 {offsets = [2, 128], sizes = [30, 128], strides = [1, 1]} : vector<36x512xf32> to vector<30x128xf32>
    %7 = arith.addf %5, %6 : vector<30x128xf32>
    %8 = vector.extract_strided_slice %4 {offsets = [4, 256], sizes = [30, 128], strides = [1, 1]} : vector<36x512xf32> to vector<30x128xf32>
    %9 = arith.addf %7, %8 : vector<30x128xf32>
    %10 = vector.extract_strided_slice %4 {offsets = [6, 384], sizes = [30, 128], strides = [1, 1]} : vector<36x512xf32> to vector<30x128xf32>
    %11 = arith.addf %9, %10 : vector<30x128xf32>
    %c0_4 = arith.constant 0 : index
    %c0_5 = arith.constant 0 : index
    %c0_6 = arith.constant 0 : index
    %12 = vector.load %arg2[%c0_4, %c0_5, %c0_6] : memref<4x24x32xbf16, #tpu.memory_space<vmem>>, vector<1x24x32xbf16>
    %13 = vector.shape_cast %12 : vector<1x24x32xbf16> to vector<24x32xbf16>
    %14 = vector.extract_strided_slice %13 {offsets = [0, 0], sizes = [20, 30], strides = [1, 1]} : vector<24x32xbf16> to vector<20x30xbf16>
    %15 = arith.truncf %11 : vector<30x128xf32> to vector<30x128xbf16>
    %cst_7 = arith.constant dense<0.000000e+00> : vector<20x128xf32>
    %16 = tpu.matmul %14, %15, %cst_7 {dimension_numbers = #tpu.dot_dimension_numbers<[1], [0], [0], [1], [0, 0, 1, 1], [], []>} : vector<20x30xbf16>, vector<30x128xbf16>, vector<20x128xf32> -> vector<20x128xf32>
    %c0_8 = arith.constant 0 : index
    %c0_9 = arith.constant 0 : index
    %c0_10 = arith.constant 0 : index
    %17 = vector.load %arg3[%c0_8, %c0_9, %c0_10] : memref<13x24x128xf32, #tpu.memory_space<vmem>>, vector<1x24x128xf32>
    %18 = vector.shape_cast %17 : vector<1x24x128xf32> to vector<24x128xf32>
    %19 = vector.extract_strided_slice %18 {offsets = [0, 0], sizes = [20, 128], strides = [1, 1]} : vector<24x128xf32> to vector<20x128xf32>
    %20 = arith.addf %16, %19 : vector<20x128xf32>
    %cst_11 = arith.constant 0.000000e+00 : f32
    %21 = vector.broadcast %cst_11 : f32 to vector<20x128xf32>
    %22 = arith.cmpf oge, %20, %21 : vector<20x128xf32>
    %cst_12 = arith.constant 2.000000e-01 : f32
    %23 = vector.broadcast %cst_12 : f32 to vector<20x128xf32>
    %24 = arith.mulf %23, %20 : vector<20x128xf32>
    %25 = arith.select %22, %20, %24 : vector<20x128xi1>, vector<20x128xf32>
    %26 = arith.truncf %25 : vector<20x128xf32> to vector<20x128xbf16>
    %c1 = arith.constant 1 : index
    %c0_13 = arith.constant 0 : index
    %c0_14 = arith.constant 0 : index
    %27 = vector.load %arg1[%c1, %c0_13, %c0_14] : memref<5x128x512xbf16, #tpu.memory_space<vmem>>, vector<1x128x512xbf16>
    %28 = vector.shape_cast %27 : vector<1x128x512xbf16> to vector<128x512xbf16>
    %cst_15 = arith.constant dense<0.000000e+00> : vector<20x512xf32>
    %29 = tpu.matmul %26, %28, %cst_15 {dimension_numbers = #tpu.dot_dimension_numbers<[1], [0], [0], [1], [0, 0, 1, 1], [], []>} : vector<20x128xbf16>, vector<128x512xbf16>, vector<20x512xf32> -> vector<20x512xf32>
    %30 = vector.extract_strided_slice %29 {offsets = [0, 0], sizes = [14, 128], strides = [1, 1]} : vector<20x512xf32> to vector<14x128xf32>
    %31 = vector.extract_strided_slice %29 {offsets = [2, 128], sizes = [14, 128], strides = [1, 1]} : vector<20x512xf32> to vector<14x128xf32>
    %32 = arith.addf %30, %31 : vector<14x128xf32>
    %33 = vector.extract_strided_slice %29 {offsets = [4, 256], sizes = [14, 128], strides = [1, 1]} : vector<20x512xf32> to vector<14x128xf32>
    %34 = arith.addf %32, %33 : vector<14x128xf32>
    %35 = vector.extract_strided_slice %29 {offsets = [6, 384], sizes = [14, 128], strides = [1, 1]} : vector<20x512xf32> to vector<14x128xf32>
    %36 = arith.addf %34, %35 : vector<14x128xf32>
    %c1_16 = arith.constant 1 : index
    %c0_17 = arith.constant 0 : index
    %c0_18 = arith.constant 0 : index
    %37 = vector.load %arg2[%c1_16, %c0_17, %c0_18] : memref<4x24x32xbf16, #tpu.memory_space<vmem>>, vector<1x24x32xbf16>
    %38 = vector.shape_cast %37 : vector<1x24x32xbf16> to vector<24x32xbf16>
    %39 = vector.extract_strided_slice %38 {offsets = [0, 0], sizes = [12, 14], strides = [1, 1]} : vector<24x32xbf16> to vector<12x14xbf16>
    %40 = arith.truncf %36 : vector<14x128xf32> to vector<14x128xbf16>
    %cst_19 = arith.constant dense<0.000000e+00> : vector<12x128xf32>
    %41 = tpu.matmul %39, %40, %cst_19 {dimension_numbers = #tpu.dot_dimension_numbers<[1], [0], [0], [1], [0, 0, 1, 1], [], []>} : vector<12x14xbf16>, vector<14x128xbf16>, vector<12x128xf32> -> vector<12x128xf32>
    %c2 = arith.constant 2 : index
    %c0_20 = arith.constant 0 : index
    %c0_21 = arith.constant 0 : index
    %42 = vector.load %arg3[%c2, %c0_20, %c0_21] : memref<13x24x128xf32, #tpu.memory_space<vmem>>, vector<1x24x128xf32>
    %43 = vector.shape_cast %42 : vector<1x24x128xf32> to vector<24x128xf32>
    %44 = vector.extract_strided_slice %43 {offsets = [0, 0], sizes = [12, 128], strides = [1, 1]} : vector<24x128xf32> to vector<12x128xf32>
    %45 = arith.addf %41, %44 : vector<12x128xf32>
    %c0_22 = arith.constant 0 : index
    %c0_23 = arith.constant 0 : index
    %c0_24 = arith.constant 0 : index
    %46 = vector.load %arg4[%c0_22, %c0_23, %c0_24] : memref<6x128x128xf32, #tpu.memory_space<vmem>>, vector<1x128x128xf32>
    %47 = vector.shape_cast %46 : vector<1x128x128xf32> to vector<128x128xf32>
    %c1_25 = arith.constant 1 : index
    %c0_26 = arith.constant 0 : index
    %c0_27 = arith.constant 0 : index
    %48 = vector.load %arg4[%c1_25, %c0_26, %c0_27] : memref<6x128x128xf32, #tpu.memory_space<vmem>>, vector<1x128x128xf32>
    %49 = vector.shape_cast %48 : vector<1x128x128xf32> to vector<128x128xf32>
    %cst_28 = arith.constant dense<0.000000e+00> : vector<128xf32>
    %50 = vector.multi_reduction <add>, %45, %cst_28 [0] : vector<12x128xf32> to vector<128xf32>
    %51 = vector.shape_cast %50 : vector<128xf32> to vector<1x128xf32>
    %52 = arith.mulf %45, %45 : vector<12x128xf32>
    %cst_29 = arith.constant dense<0.000000e+00> : vector<128xf32>
    %53 = vector.multi_reduction <add>, %52, %cst_29 [0] : vector<12x128xf32> to vector<128xf32>
    %54 = vector.shape_cast %53 : vector<128xf32> to vector<1x128xf32>
    %55 = tpu.concatenate %51, %54 in 0 : vector<1x128xf32>, vector<1x128xf32> -> vector<2x128xf32>
    %cst_30 = arith.constant dense<0.000000e+00> : vector<2x128xf32>
    %56 = tpu.matmul %55, %47, %cst_30 {dimension_numbers = #tpu.dot_dimension_numbers<[1], [0], [0], [1], [0, 0, 1, 1], [], []>} : vector<2x128xf32>, vector<128x128xf32>, vector<2x128xf32> -> vector<2x128xf32>
    %cst_31 = arith.constant 3.125000e-02 : f32
    %57 = vector.broadcast %cst_31 : f32 to vector<2x128xf32>
    %58 = arith.mulf %56, %57 : vector<2x128xf32>
    %59 = vector.extract_strided_slice %58 {offsets = [0, 0], sizes = [1, 128], strides = [1, 1]} : vector<2x128xf32> to vector<1x128xf32>
    %60 = vector.extract_strided_slice %58 {offsets = [1, 0], sizes = [1, 128], strides = [1, 1]} : vector<2x128xf32> to vector<1x128xf32>
    %61 = arith.mulf %59, %59 : vector<1x128xf32>
    %62 = arith.subf %60, %61 : vector<1x128xf32>
    %cst_32 = arith.constant 9.99999974E-6 : f32
    %63 = vector.broadcast %cst_32 : f32 to vector<1x128xf32>
    %64 = arith.addf %62, %63 : vector<1x128xf32>
    %65 = math.rsqrt %64 : vector<1x128xf32>
    %c10 = arith.constant 10 : index
    %c0_33 = arith.constant 0 : index
    %c0_34 = arith.constant 0 : index
    %66 = vector.load %arg3[%c10, %c0_33, %c0_34] : memref<13x24x128xf32, #tpu.memory_space<vmem>>, vector<1x24x128xf32>
    %67 = vector.shape_cast %66 : vector<1x24x128xf32> to vector<24x128xf32>
    %68 = vector.extract_strided_slice %67 {offsets = [0, 0], sizes = [2, 128], strides = [1, 1]} : vector<24x128xf32> to vector<2x128xf32>
    %69 = vector.extract_strided_slice %68 {offsets = [0, 0], sizes = [1, 128], strides = [1, 1]} : vector<2x128xf32> to vector<1x128xf32>
    %70 = arith.mulf %69, %65 : vector<1x128xf32>
    %71 = vector.extract_strided_slice %68 {offsets = [1, 0], sizes = [1, 128], strides = [1, 1]} : vector<2x128xf32> to vector<1x128xf32>
    %72 = arith.mulf %59, %70 : vector<1x128xf32>
    %73 = arith.subf %71, %72 : vector<1x128xf32>
    %74 = tpu.concatenate %70, %73 in 0 : vector<1x128xf32>, vector<1x128xf32> -> vector<2x128xf32>
    %cst_35 = arith.constant dense<0.000000e+00> : vector<2x128xf32>
    %75 = tpu.matmul %74, %49, %cst_35 {dimension_numbers = #tpu.dot_dimension_numbers<[1], [0], [0], [1], [0, 0, 1, 1], [], []>} : vector<2x128xf32>, vector<128x128xf32>, vector<2x128xf32> -> vector<2x128xf32>
    %76 = vector.extract_strided_slice %75 {offsets = [0, 0], sizes = [1, 128], strides = [1, 1]} : vector<2x128xf32> to vector<1x128xf32>
    %77 = vector.broadcast %76 : vector<1x128xf32> to vector<12x128xf32>
    %78 = arith.mulf %45, %77 : vector<12x128xf32>
    %79 = vector.extract_strided_slice %75 {offsets = [1, 0], sizes = [1, 128], strides = [1, 1]} : vector<2x128xf32> to vector<1x128xf32>
    %80 = vector.broadcast %79 : vector<1x128xf32> to vector<12x128xf32>
    %81 = arith.addf %78, %80 : vector<12x128xf32>
    %cst_36 = arith.constant 0.000000e+00 : f32
    %82 = vector.broadcast %cst_36 : f32 to vector<12x128xf32>
    %83 = arith.cmpf oge, %81, %82 : vector<12x128xf32>
    %cst_37 = arith.constant 2.000000e-01 : f32
    %84 = vector.broadcast %cst_37 : f32 to vector<12x128xf32>
    %85 = arith.mulf %84, %81 : vector<12x128xf32>
    %86 = arith.select %83, %81, %85 : vector<12x128xi1>, vector<12x128xf32>
    %c3 = arith.constant 3 : index
    %c0_38 = arith.constant 0 : index
    %c0_39 = arith.constant 0 : index
    %87 = vector.load %arg3[%c3, %c0_38, %c0_39] : memref<13x24x128xf32, #tpu.memory_space<vmem>>, vector<1x24x128xf32>
    %88 = vector.shape_cast %87 : vector<1x24x128xf32> to vector<24x128xf32>
    %89 = vector.extract_strided_slice %88 {offsets = [0, 0], sizes = [12, 128], strides = [1, 1]} : vector<24x128xf32> to vector<12x128xf32>
    %90 = arith.mulf %86, %89 : vector<12x128xf32>
    %91 = arith.truncf %90 : vector<12x128xf32> to vector<12x128xbf16>
    %c2_40 = arith.constant 2 : index
    %c0_41 = arith.constant 0 : index
    %c0_42 = arith.constant 0 : index
    %92 = vector.load %arg1[%c2_40, %c0_41, %c0_42] : memref<5x128x512xbf16, #tpu.memory_space<vmem>>, vector<1x128x512xbf16>
    %93 = vector.shape_cast %92 : vector<1x128x512xbf16> to vector<128x512xbf16>
    %cst_43 = arith.constant dense<0.000000e+00> : vector<12x512xf32>
    %94 = tpu.matmul %91, %93, %cst_43 {dimension_numbers = #tpu.dot_dimension_numbers<[1], [0], [0], [1], [0, 0, 1, 1], [], []>} : vector<12x128xbf16>, vector<128x512xbf16>, vector<12x512xf32> -> vector<12x512xf32>
    %95 = vector.extract_strided_slice %94 {offsets = [0, 0], sizes = [6, 128], strides = [1, 1]} : vector<12x512xf32> to vector<6x128xf32>
    %96 = vector.extract_strided_slice %94 {offsets = [2, 128], sizes = [6, 128], strides = [1, 1]} : vector<12x512xf32> to vector<6x128xf32>
    %97 = arith.addf %95, %96 : vector<6x128xf32>
    %98 = vector.extract_strided_slice %94 {offsets = [4, 256], sizes = [6, 128], strides = [1, 1]} : vector<12x512xf32> to vector<6x128xf32>
    %99 = arith.addf %97, %98 : vector<6x128xf32>
    %100 = vector.extract_strided_slice %94 {offsets = [6, 384], sizes = [6, 128], strides = [1, 1]} : vector<12x512xf32> to vector<6x128xf32>
    %101 = arith.addf %99, %100 : vector<6x128xf32>
    %c2_44 = arith.constant 2 : index
    %c0_45 = arith.constant 0 : index
    %c0_46 = arith.constant 0 : index
    %102 = vector.load %arg2[%c2_44, %c0_45, %c0_46] : memref<4x24x32xbf16, #tpu.memory_space<vmem>>, vector<1x24x32xbf16>
    %103 = vector.shape_cast %102 : vector<1x24x32xbf16> to vector<24x32xbf16>
    %104 = vector.extract_strided_slice %103 {offsets = [0, 0], sizes = [8, 6], strides = [1, 1]} : vector<24x32xbf16> to vector<8x6xbf16>
    %105 = arith.truncf %101 : vector<6x128xf32> to vector<6x128xbf16>
    %cst_47 = arith.constant dense<0.000000e+00> : vector<8x128xf32>
    %106 = tpu.matmul %104, %105, %cst_47 {dimension_numbers = #tpu.dot_dimension_numbers<[1], [0], [0], [1], [0, 0, 1, 1], [], []>} : vector<8x6xbf16>, vector<6x128xbf16>, vector<8x128xf32> -> vector<8x128xf32>
    %c4 = arith.constant 4 : index
    %c0_48 = arith.constant 0 : index
    %c0_49 = arith.constant 0 : index
    %107 = vector.load %arg3[%c4, %c0_48, %c0_49] : memref<13x24x128xf32, #tpu.memory_space<vmem>>, vector<1x24x128xf32>
    %108 = vector.shape_cast %107 : vector<1x24x128xf32> to vector<24x128xf32>
    %109 = vector.extract_strided_slice %108 {offsets = [0, 0], sizes = [8, 128], strides = [1, 1]} : vector<24x128xf32> to vector<8x128xf32>
    %110 = arith.addf %106, %109 : vector<8x128xf32>
    %c2_50 = arith.constant 2 : index
    %c0_51 = arith.constant 0 : index
    %c0_52 = arith.constant 0 : index
    %111 = vector.load %arg4[%c2_50, %c0_51, %c0_52] : memref<6x128x128xf32, #tpu.memory_space<vmem>>, vector<1x128x128xf32>
    %112 = vector.shape_cast %111 : vector<1x128x128xf32> to vector<128x128xf32>
    %c3_53 = arith.constant 3 : index
    %c0_54 = arith.constant 0 : index
    %c0_55 = arith.constant 0 : index
    %113 = vector.load %arg4[%c3_53, %c0_54, %c0_55] : memref<6x128x128xf32, #tpu.memory_space<vmem>>, vector<1x128x128xf32>
    %114 = vector.shape_cast %113 : vector<1x128x128xf32> to vector<128x128xf32>
    %cst_56 = arith.constant dense<0.000000e+00> : vector<128xf32>
    %115 = vector.multi_reduction <add>, %110, %cst_56 [0] : vector<8x128xf32> to vector<128xf32>
    %116 = vector.shape_cast %115 : vector<128xf32> to vector<1x128xf32>
    %117 = arith.mulf %110, %110 : vector<8x128xf32>
    %cst_57 = arith.constant dense<0.000000e+00> : vector<128xf32>
    %118 = vector.multi_reduction <add>, %117, %cst_57 [0] : vector<8x128xf32> to vector<128xf32>
    %119 = vector.shape_cast %118 : vector<128xf32> to vector<1x128xf32>
    %120 = tpu.concatenate %116, %119 in 0 : vector<1x128xf32>, vector<1x128xf32> -> vector<2x128xf32>
    %cst_58 = arith.constant dense<0.000000e+00> : vector<2x128xf32>
    %121 = tpu.matmul %120, %112, %cst_58 {dimension_numbers = #tpu.dot_dimension_numbers<[1], [0], [0], [1], [0, 0, 1, 1], [], []>} : vector<2x128xf32>, vector<128x128xf32>, vector<2x128xf32> -> vector<2x128xf32>
    %cst_59 = arith.constant 1.250000e-01 : f32
    %122 = vector.broadcast %cst_59 : f32 to vector<2x128xf32>
    %123 = arith.mulf %121, %122 : vector<2x128xf32>
    %124 = vector.extract_strided_slice %123 {offsets = [0, 0], sizes = [1, 128], strides = [1, 1]} : vector<2x128xf32> to vector<1x128xf32>
    %125 = vector.extract_strided_slice %123 {offsets = [1, 0], sizes = [1, 128], strides = [1, 1]} : vector<2x128xf32> to vector<1x128xf32>
    %126 = arith.mulf %124, %124 : vector<1x128xf32>
    %127 = arith.subf %125, %126 : vector<1x128xf32>
    %cst_60 = arith.constant 9.99999974E-6 : f32
    %128 = vector.broadcast %cst_60 : f32 to vector<1x128xf32>
    %129 = arith.addf %127, %128 : vector<1x128xf32>
    %130 = math.rsqrt %129 : vector<1x128xf32>
    %c11 = arith.constant 11 : index
    %c0_61 = arith.constant 0 : index
    %c0_62 = arith.constant 0 : index
    %131 = vector.load %arg3[%c11, %c0_61, %c0_62] : memref<13x24x128xf32, #tpu.memory_space<vmem>>, vector<1x24x128xf32>
    %132 = vector.shape_cast %131 : vector<1x24x128xf32> to vector<24x128xf32>
    %133 = vector.extract_strided_slice %132 {offsets = [0, 0], sizes = [2, 128], strides = [1, 1]} : vector<24x128xf32> to vector<2x128xf32>
    %134 = vector.extract_strided_slice %133 {offsets = [0, 0], sizes = [1, 128], strides = [1, 1]} : vector<2x128xf32> to vector<1x128xf32>
    %135 = arith.mulf %134, %130 : vector<1x128xf32>
    %136 = vector.extract_strided_slice %133 {offsets = [1, 0], sizes = [1, 128], strides = [1, 1]} : vector<2x128xf32> to vector<1x128xf32>
    %137 = arith.mulf %124, %135 : vector<1x128xf32>
    %138 = arith.subf %136, %137 : vector<1x128xf32>
    %139 = tpu.concatenate %135, %138 in 0 : vector<1x128xf32>, vector<1x128xf32> -> vector<2x128xf32>
    %cst_63 = arith.constant dense<0.000000e+00> : vector<2x128xf32>
    %140 = tpu.matmul %139, %114, %cst_63 {dimension_numbers = #tpu.dot_dimension_numbers<[1], [0], [0], [1], [0, 0, 1, 1], [], []>} : vector<2x128xf32>, vector<128x128xf32>, vector<2x128xf32> -> vector<2x128xf32>
    %141 = vector.extract_strided_slice %140 {offsets = [0, 0], sizes = [1, 128], strides = [1, 1]} : vector<2x128xf32> to vector<1x128xf32>
    %142 = vector.broadcast %141 : vector<1x128xf32> to vector<8x128xf32>
    %143 = arith.mulf %110, %142 : vector<8x128xf32>
    %144 = vector.extract_strided_slice %140 {offsets = [1, 0], sizes = [1, 128], strides = [1, 1]} : vector<2x128xf32> to vector<1x128xf32>
    %145 = vector.broadcast %144 : vector<1x128xf32> to vector<8x128xf32>
    %146 = arith.addf %143, %145 : vector<8x128xf32>
    %cst_64 = arith.constant 0.000000e+00 : f32
    %147 = vector.broadcast %cst_64 : f32 to vector<8x128xf32>
    %148 = arith.cmpf oge, %146, %147 : vector<8x128xf32>
    %cst_65 = arith.constant 2.000000e-01 : f32
    %149 = vector.broadcast %cst_65 : f32 to vector<8x128xf32>
    %150 = arith.mulf %149, %146 : vector<8x128xf32>
    %151 = arith.select %148, %146, %150 : vector<8x128xi1>, vector<8x128xf32>
    %c5 = arith.constant 5 : index
    %c0_66 = arith.constant 0 : index
    %c0_67 = arith.constant 0 : index
    %152 = vector.load %arg3[%c5, %c0_66, %c0_67] : memref<13x24x128xf32, #tpu.memory_space<vmem>>, vector<1x24x128xf32>
    %153 = vector.shape_cast %152 : vector<1x24x128xf32> to vector<24x128xf32>
    %154 = vector.extract_strided_slice %153 {offsets = [0, 0], sizes = [8, 128], strides = [1, 1]} : vector<24x128xf32> to vector<8x128xf32>
    %155 = arith.mulf %151, %154 : vector<8x128xf32>
    %156 = arith.truncf %155 : vector<8x128xf32> to vector<8x128xbf16>
    %c3_68 = arith.constant 3 : index
    %c0_69 = arith.constant 0 : index
    %c0_70 = arith.constant 0 : index
    %157 = vector.load %arg1[%c3_68, %c0_69, %c0_70] : memref<5x128x512xbf16, #tpu.memory_space<vmem>>, vector<1x128x512xbf16>
    %158 = vector.shape_cast %157 : vector<1x128x512xbf16> to vector<128x512xbf16>
    %cst_71 = arith.constant dense<0.000000e+00> : vector<8x512xf32>
    %159 = tpu.matmul %156, %158, %cst_71 {dimension_numbers = #tpu.dot_dimension_numbers<[1], [0], [0], [1], [0, 0, 1, 1], [], []>} : vector<8x128xbf16>, vector<128x512xbf16>, vector<8x512xf32> -> vector<8x512xf32>
    %160 = vector.extract_strided_slice %159 {offsets = [0, 0], sizes = [2, 128], strides = [1, 1]} : vector<8x512xf32> to vector<2x128xf32>
    %161 = vector.extract_strided_slice %159 {offsets = [2, 128], sizes = [2, 128], strides = [1, 1]} : vector<8x512xf32> to vector<2x128xf32>
    %162 = arith.addf %160, %161 : vector<2x128xf32>
    %163 = vector.extract_strided_slice %159 {offsets = [4, 256], sizes = [2, 128], strides = [1, 1]} : vector<8x512xf32> to vector<2x128xf32>
    %164 = arith.addf %162, %163 : vector<2x128xf32>
    %165 = vector.extract_strided_slice %159 {offsets = [6, 384], sizes = [2, 128], strides = [1, 1]} : vector<8x512xf32> to vector<2x128xf32>
    %166 = arith.addf %164, %165 : vector<2x128xf32>
    %c6 = arith.constant 6 : index
    %c0_72 = arith.constant 0 : index
    %c0_73 = arith.constant 0 : index
    %167 = vector.load %arg3[%c6, %c0_72, %c0_73] : memref<13x24x128xf32, #tpu.memory_space<vmem>>, vector<1x24x128xf32>
    %168 = vector.shape_cast %167 : vector<1x24x128xf32> to vector<24x128xf32>
    %169 = vector.extract_strided_slice %168 {offsets = [0, 0], sizes = [2, 128], strides = [1, 1]} : vector<24x128xf32> to vector<2x128xf32>
    %170 = arith.addf %166, %169 : vector<2x128xf32>
    %c4_74 = arith.constant 4 : index
    %c0_75 = arith.constant 0 : index
    %c0_76 = arith.constant 0 : index
    %171 = vector.load %arg4[%c4_74, %c0_75, %c0_76] : memref<6x128x128xf32, #tpu.memory_space<vmem>>, vector<1x128x128xf32>
    %172 = vector.shape_cast %171 : vector<1x128x128xf32> to vector<128x128xf32>
    %c5_77 = arith.constant 5 : index
    %c0_78 = arith.constant 0 : index
    %c0_79 = arith.constant 0 : index
    %173 = vector.load %arg4[%c5_77, %c0_78, %c0_79] : memref<6x128x128xf32, #tpu.memory_space<vmem>>, vector<1x128x128xf32>
    %174 = vector.shape_cast %173 : vector<1x128x128xf32> to vector<128x128xf32>
    %cst_80 = arith.constant dense<0.000000e+00> : vector<128xf32>
    %175 = vector.multi_reduction <add>, %170, %cst_80 [0] : vector<2x128xf32> to vector<128xf32>
    %176 = vector.shape_cast %175 : vector<128xf32> to vector<1x128xf32>
    %177 = arith.mulf %170, %170 : vector<2x128xf32>
    %cst_81 = arith.constant dense<0.000000e+00> : vector<128xf32>
    %178 = vector.multi_reduction <add>, %177, %cst_81 [0] : vector<2x128xf32> to vector<128xf32>
    %179 = vector.shape_cast %178 : vector<128xf32> to vector<1x128xf32>
    %180 = tpu.concatenate %176, %179 in 0 : vector<1x128xf32>, vector<1x128xf32> -> vector<2x128xf32>
    %cst_82 = arith.constant dense<0.000000e+00> : vector<2x128xf32>
    %181 = tpu.matmul %180, %172, %cst_82 {dimension_numbers = #tpu.dot_dimension_numbers<[1], [0], [0], [1], [0, 0, 1, 1], [], []>} : vector<2x128xf32>, vector<128x128xf32>, vector<2x128xf32> -> vector<2x128xf32>
    %cst_83 = arith.constant 5.000000e-01 : f32
    %182 = vector.broadcast %cst_83 : f32 to vector<2x128xf32>
    %183 = arith.mulf %181, %182 : vector<2x128xf32>
    %184 = vector.extract_strided_slice %183 {offsets = [0, 0], sizes = [1, 128], strides = [1, 1]} : vector<2x128xf32> to vector<1x128xf32>
    %185 = vector.extract_strided_slice %183 {offsets = [1, 0], sizes = [1, 128], strides = [1, 1]} : vector<2x128xf32> to vector<1x128xf32>
    %186 = arith.mulf %184, %184 : vector<1x128xf32>
    %187 = arith.subf %185, %186 : vector<1x128xf32>
    %cst_84 = arith.constant 9.99999974E-6 : f32
    %188 = vector.broadcast %cst_84 : f32 to vector<1x128xf32>
    %189 = arith.addf %187, %188 : vector<1x128xf32>
    %190 = math.rsqrt %189 : vector<1x128xf32>
    %c12 = arith.constant 12 : index
    %c0_85 = arith.constant 0 : index
    %c0_86 = arith.constant 0 : index
    %191 = vector.load %arg3[%c12, %c0_85, %c0_86] : memref<13x24x128xf32, #tpu.memory_space<vmem>>, vector<1x24x128xf32>
    %192 = vector.shape_cast %191 : vector<1x24x128xf32> to vector<24x128xf32>
    %193 = vector.extract_strided_slice %192 {offsets = [0, 0], sizes = [2, 128], strides = [1, 1]} : vector<24x128xf32> to vector<2x128xf32>
    %194 = vector.extract_strided_slice %193 {offsets = [0, 0], sizes = [1, 128], strides = [1, 1]} : vector<2x128xf32> to vector<1x128xf32>
    %195 = arith.mulf %194, %190 : vector<1x128xf32>
    %196 = vector.extract_strided_slice %193 {offsets = [1, 0], sizes = [1, 128], strides = [1, 1]} : vector<2x128xf32> to vector<1x128xf32>
    %197 = arith.mulf %184, %195 : vector<1x128xf32>
    %198 = arith.subf %196, %197 : vector<1x128xf32>
    %199 = tpu.concatenate %195, %198 in 0 : vector<1x128xf32>, vector<1x128xf32> -> vector<2x128xf32>
    %cst_87 = arith.constant dense<0.000000e+00> : vector<2x128xf32>
    %200 = tpu.matmul %199, %174, %cst_87 {dimension_numbers = #tpu.dot_dimension_numbers<[1], [0], [0], [1], [0, 0, 1, 1], [], []>} : vector<2x128xf32>, vector<128x128xf32>, vector<2x128xf32> -> vector<2x128xf32>
    %201 = vector.extract_strided_slice %200 {offsets = [0, 0], sizes = [1, 128], strides = [1, 1]} : vector<2x128xf32> to vector<1x128xf32>
    %202 = vector.broadcast %201 : vector<1x128xf32> to vector<2x128xf32>
    %203 = arith.mulf %170, %202 : vector<2x128xf32>
    %204 = vector.extract_strided_slice %200 {offsets = [1, 0], sizes = [1, 128], strides = [1, 1]} : vector<2x128xf32> to vector<1x128xf32>
    %205 = vector.broadcast %204 : vector<1x128xf32> to vector<2x128xf32>
    %206 = arith.addf %203, %205 : vector<2x128xf32>
    %cst_88 = arith.constant 0.000000e+00 : f32
    %207 = vector.broadcast %cst_88 : f32 to vector<2x128xf32>
    %208 = arith.cmpf oge, %206, %207 : vector<2x128xf32>
    %cst_89 = arith.constant 2.000000e-01 : f32
    %209 = vector.broadcast %cst_89 : f32 to vector<2x128xf32>
    %210 = arith.mulf %209, %206 : vector<2x128xf32>
    %211 = arith.select %208, %206, %210 : vector<2x128xi1>, vector<2x128xf32>
    %c7 = arith.constant 7 : index
    %c0_90 = arith.constant 0 : index
    %c0_91 = arith.constant 0 : index
    %212 = vector.load %arg3[%c7, %c0_90, %c0_91] : memref<13x24x128xf32, #tpu.memory_space<vmem>>, vector<1x24x128xf32>
    %213 = vector.shape_cast %212 : vector<1x24x128xf32> to vector<24x128xf32>
    %214 = vector.extract_strided_slice %213 {offsets = [0, 0], sizes = [2, 128], strides = [1, 1]} : vector<24x128xf32> to vector<2x128xf32>
    %215 = arith.mulf %211, %214 : vector<2x128xf32>
    %c4_92 = arith.constant 4 : index
    %c0_93 = arith.constant 0 : index
    %c0_94 = arith.constant 0 : index
    %216 = vector.load %arg1[%c4_92, %c0_93, %c0_94] : memref<5x128x512xbf16, #tpu.memory_space<vmem>>, vector<1x128x512xbf16>
    %217 = vector.shape_cast %216 : vector<1x128x512xbf16> to vector<128x512xbf16>
    %c8 = arith.constant 8 : index
    %c0_95 = arith.constant 0 : index
    %c0_96 = arith.constant 0 : index
    %218 = vector.load %arg3[%c8, %c0_95, %c0_96] : memref<13x24x128xf32, #tpu.memory_space<vmem>>, vector<1x24x128xf32>
    %219 = vector.shape_cast %218 : vector<1x24x128xf32> to vector<24x128xf32>
    %220 = vector.extract_strided_slice %219 {offsets = [0, 0], sizes = [1, 128], strides = [1, 1]} : vector<24x128xf32> to vector<1x128xf32>
    %c9 = arith.constant 9 : index
    %c0_97 = arith.constant 0 : index
    %c0_98 = arith.constant 0 : index
    %221 = vector.load %arg3[%c9, %c0_97, %c0_98] : memref<13x24x128xf32, #tpu.memory_space<vmem>>, vector<1x24x128xf32>
    %222 = vector.shape_cast %221 : vector<1x24x128xf32> to vector<24x128xf32>
    %223 = vector.extract_strided_slice %222 {offsets = [0, 0], sizes = [1, 128], strides = [1, 1]} : vector<24x128xf32> to vector<1x128xf32>
    %224 = arith.truncf %215 : vector<2x128xf32> to vector<2x128xbf16>
    %225 = vector.extract_strided_slice %217 {offsets = [0, 0], sizes = [128, 128], strides = [1, 1]} : vector<128x512xbf16> to vector<128x128xbf16>
    %cst_99 = arith.constant dense<0.000000e+00> : vector<2x128xf32>
    %226 = tpu.matmul %224, %225, %cst_99 {dimension_numbers = #tpu.dot_dimension_numbers<[1], [0], [0], [1], [0, 0, 1, 1], [], []>} : vector<2x128xbf16>, vector<128x128xbf16>, vector<2x128xf32> -> vector<2x128xf32>
    %227 = vector.broadcast %220 : vector<1x128xf32> to vector<2x128xf32>
    %228 = arith.addf %226, %227 : vector<2x128xf32>
    %cst_100 = arith.constant 0.000000e+00 : f32
    %229 = vector.broadcast %cst_100 : f32 to vector<2x128xf32>
    %230 = arith.cmpf oge, %228, %229 : vector<2x128xf32>
    %cst_101 = arith.constant 2.000000e-01 : f32
    %231 = vector.broadcast %cst_101 : f32 to vector<2x128xf32>
    %232 = arith.mulf %231, %228 : vector<2x128xf32>
    %233 = arith.select %230, %228, %232 : vector<2x128xi1>, vector<2x128xf32>
    %234 = arith.truncf %233 : vector<2x128xf32> to vector<2x128xbf16>
    %235 = vector.extract_strided_slice %217 {offsets = [0, 128], sizes = [128, 128], strides = [1, 1]} : vector<128x512xbf16> to vector<128x128xbf16>
    %cst_102 = arith.constant dense<0.000000e+00> : vector<2x128xf32>
    %236 = tpu.matmul %234, %235, %cst_102 {dimension_numbers = #tpu.dot_dimension_numbers<[1], [0], [0], [1], [0, 0, 1, 1], [], []>} : vector<2x128xbf16>, vector<128x128xbf16>, vector<2x128xf32> -> vector<2x128xf32>
    %237 = vector.broadcast %223 : vector<1x128xf32> to vector<2x128xf32>
    %238 = arith.addf %236, %237 : vector<2x128xf32>
    %239 = vector.extract_strided_slice %238 {offsets = [0, 0], sizes = [2, 4], strides = [1, 1]} : vector<2x128xf32> to vector<2x4xf32>
    %c0_103 = arith.constant 0 : index
    %c0_104 = arith.constant 0 : index
    %240 = vector.load %arg5[%c0_103, %c0_104] : memref<2x4xf32, #tpu.memory_space<vmem>>, vector<2x4xf32>
    tpu.vector_store %arg5[%c0_103, %c0_104], %239 {strides = array<i32>} : memref<2x4xf32, #tpu.memory_space<vmem>>, vector<2x4xf32>,
    return
  }
}

</mosaic_0001>

<llo_original>
// kernel: forward.1
$region0: #{forward.1}
  #allocation0 [shape = 'u32[]', space=smem, size = 0x4, offset = 0x4, fixed_abs, tag = 'smem constant byte address 0x4 - core index']
  #allocation1 [shape = 'u32[144,128]{1,0:T(1,128)}', space=vmem, size = 0x12000, scoped, tag = 'internal scratch']
  %s0 = inlined_call_operand.vmem [shape: f32[36,128], index: 0, kind: input, shape index: {}]
  %s1 = inlined_call_operand.vmem [shape: bf16[5,128,512], index: 1, kind: input, shape index: {}]
  %s2 = inlined_call_operand.hbm [shape: bf16[4,24,32], index: 2, kind: input, shape index: {}]
  %s3 = inlined_call_operand.vmem [shape: f32[13,24,128], index: 3, kind: input, shape index: {}]
  %s4 = inlined_call_operand.vmem [shape: f32[6,128,128], index: 4, kind: input, shape index: {}]
  %s5 = inlined_call_operand.hbm [shape: f32[2,4], index: 5, kind: output, shape index: {}]
  %s6 = sld [smem:[#allocation0]]
  $region34: #{forward.1} parent=0
    _
  %s8 = ssub.s32 1, %s6
  %s9 = scalar_select 0, %s8, %s6
  $region1: #{forward.1} parent=0
    #allocation2 [shape = 'u8[24576]{0}', space=vmem, size = 0x6000, scoped, tag = 'input window, operand 2, single buffered']
    #allocation3 [shape = 's32[1]{0}', space=sflag, size = 0x4, scoped, tag = 'scoped memory for forward.1']
    #allocation4 [shape = 's32[1]{0}', space=sflag, size = 0x4, scoped, tag = 'scoped memory for forward.1']
    #allocation5 [shape = 'u8[1024]{0}', space=vmem, size = 0x400, scoped, tag = 'output window, operand 0, single buffered']
    %10 = vsyncpa [#allocation3], 0
    %11 = vsyncpa [#allocation4], 0
    // Predicated region
    $region2: #{forward.1} parent=1 // pred_check
      _
    $region3: #{forward.1} parent=1 // pred_check_branch
      %13 = sbr.rel (0) target = $region5
    $region4: #{forward.1} parent=1 // pred_region
      _
    $region5: #{forward.1} parent=1 // pred_fallthru
      _
    // Predicated region
    $region6: #{forward.1} parent=1 // pred_check
      _
    $region7: #{forward.1} parent=1 // pred_check_branch
      %15 = sbr.rel (0) target = $region9
    $region8: #{forward.1} parent=1 // pred_region
      _
    $region9: #{forward.1} parent=1 // pred_fallthru
      _
    // Predicated region
    $region10: #{forward.1} parent=1 // pred_check
      _
    $region11: #{forward.1} parent=1 // pred_check_branch
      %17 = sbr.rel (0) target = $region13
    $region12: #{forward.1} parent=1 // pred_region
      %s19 = ssub.s32 768, 768
      %20 = vsyncadd [#allocation3], %s19
      %s21 = sshll.u32 [#allocation2], 4
      %s22 = int_to_ptr.vmem [resolvable:$true] %s21
      %27 = dma.hbm_to_vmem [thread:$0]  %s2, 768, %s22, [#allocation3], 64, 64, 4
    $region13: #{forward.1} parent=1 // pred_fallthru
      _
    // Predicated region
    $region14: #{forward.1} parent=1 // pred_check
      _
    $region15: #{forward.1} parent=1 // pred_check_branch
      %29 = sbr.rel (0) target = $region17
    $region16: #{forward.1} parent=1 // pred_region
      _
    $region17: #{forward.1} parent=1 // pred_fallthru
      _
    // Predicated region
    $region18: #{forward.1} parent=1 // pred_check
      _
    $region19: #{forward.1} parent=1 // pred_check_branch
      %31 = sbr.rel (0) target = $region21
    $region20: #{forward.1} parent=1 // pred_region
      _
    $region21: #{forward.1} parent=1 // pred_fallthru
      _
    // Predicated region
    $region22: #{forward.1} parent=1 // pred_check
      _
    $region23: #{forward.1} parent=1 // pred_check_branch
      %33 = sbr.rel (0) target = $region25
    $region24: #{forward.1} parent=1 // pred_region
      %34 = dma.done [#allocation3], 768
    $region25: #{forward.1} parent=1 // pred_fallthru
      _
    %v36 = vld [vmem:[%s0] sm:$0xff]
    %v37 = vld [vmem:[%s0 + $0x8] sm:$0xff]
    %v38 = vld [vmem:[%s0 + $0x10] sm:$0xff]
    %v39 = vld [vmem:[%s0 + $0x18] sm:$0xff]
    %v40 = vld [vmem:[%s0 + $0x20] sm:$0xf]
    %v41 = vpack.c.bf16 %v37, %v36
    %v42 = vpack.c.bf16 %v39, %v38
    %v43 = vpack.c.bf16 %v40, %v40
    %v44 = vld [vmem:[%s1] sm:$0xff]
    %v45 = vld [vmem:[%s1 + $0x8] sm:$0xff]
    %v46 = vld [vmem:[%s1 + $0x10] sm:$0xff]
    %v47 = vld [vmem:[%s1 + $0x18] sm:$0xff]
    %v48 = vld [vmem:[%s1 + $0x20] sm:$0xff]
    %v49 = vld [vmem:[%s1 + $0x28] sm:$0xff]
    %v50 = vld [vmem:[%s1 + $0x30] sm:$0xff]
    %v51 = vld [vmem:[%s1 + $0x38] sm:$0xff]
    %v52 = vld [vmem:[%s1 + $0x40] sm:$0xff]
    %v53 = vld [vmem:[%s1 + $0x48] sm:$0xff]
    %v54 = vld [vmem:[%s1 + $0x50] sm:$0xff]
    %v55 = vld [vmem:[%s1 + $0x58] sm:$0xff]
    %v56 = vld [vmem:[%s1 + $0x60] sm:$0xff]
    %v57 = vld [vmem:[%s1 + $0x68] sm:$0xff]
    %v58 = vld [vmem:[%s1 + $0x70] sm:$0xff]
    %v59 = vld [vmem:[%s1 + $0x78] sm:$0xff]
    %v60 = vld [vmem:[%s1 + $0x80] sm:$0xff]
    %v61 = vld [vmem:[%s1 + $0x88] sm:$0xff]
    %v62 = vld [vmem:[%s1 + $0x90] sm:$0xff]
    %v63 = vld [vmem:[%s1 + $0x98] sm:$0xff]
    %v64 = vld [vmem:[%s1 + $0xa0] sm:$0xff]
    %v65 = vld [vmem:[%s1 + $0xa8] sm:$0xff]
    %v66 = vld [vmem:[%s1 + $0xb0] sm:$0xff]
    %v67 = vld [vmem:[%s1 + $0xb8] sm:$0xff]
    %v68 = vld [vmem:[%s1 + $0xc0] sm:$0xff]
    %v69 = vld [vmem:[%s1 + $0xc8] sm:$0xff]
    %v70 = vld [vmem:[%s1 + $0xd0] sm:$0xff]
    %v71 = vld [vmem:[%s1 + $0xd8] sm:$0xff]
    %v72 = vld [vmem:[%s1 + $0xe0] sm:$0xff]
    %v73 = vld [vmem:[%s1 + $0xe8] sm:$0xff]
    %v74 = vld [vmem:[%s1 + $0xf0] sm:$0xff]
    %v75 = vld [vmem:[%s1 + $0xf8] sm:$0xff]
    %v108 = vunpack.c.l.b16 %v44
    %v109 = vunpack.c.h.b16 %v44
    %v110 = vunpack.c.l.b16 %v45
    %v111 = vunpack.c.h.b16 %v45
    %v112 = vunpack.c.l.b16 %v46
    %v113 = vunpack.c.h.b16 %v46
    %v114 = vunpack.c.l.b16 %v47
    %v115 = vunpack.c.h.b16 %v47
    %v116 = vunpack.c.l.b16 %v48
    %v117 = vunpack.c.h.b16 %v48
    %v118 = vunpack.c.l.b16 %v49
    %v119 = vunpack.c.h.b16 %v49
    %v120 = vunpack.c.l.b16 %v50
    %v121 = vunpack.c.h.b16 %v50
    %v122 = vunpack.c.l.b16 %v51
    %v123 = vunpack.c.h.b16 %v51
    %v124 = vunpack.c.l.b16 %v52
    %v125 = vunpack.c.h.b16 %v52
    %v126 = vunpack.c.l.b16 %v53
    %v127 = vunpack.c.h.b16 %v53
    %v128 = vunpack.c.l.b16 %v54
    %v129 = vunpack.c.h.b16 %v54
    %v130 = vunpack.c.l.b16 %v55
    %v131 = vunpack.c.h.b16 %v55
    %v132 = vunpack.c.l.b16 %v56
    %v133 = vunpack.c.h.b16 %v56
    %v134 = vunpack.c.l.b16 %v57
    %v135 = vunpack.c.h.b16 %v57
    %v136 = vunpack.c.l.b16 %v58
    %v137 = vunpack.c.h.b16 %v58
    %v138 = vunpack.c.l.b16 %v59
    %v139 = vunpack.c.h.b16 %v59
    %v140 = vunpack.c.l.b16 %v60
    %v141 = vunpack.c.h.b16 %v60
    %v142 = vunpack.c.l.b16 %v61
    %v143 = vunpack.c.h.b16 %v61
    %v144 = vunpack.c.l.b16 %v62
    %v145 = vunpack.c.h.b16 %v62
    %v146 = vunpack.c.l.b16 %v63
    %v147 = vunpack.c.h.b16 %v63
    %v148 = vunpack.c.l.b16 %v64
    %v149 = vunpack.c.h.b16 %v64
    %v150 = vunpack.c.l.b16 %v65
    %v151 = vunpack.c.h.b16 %v65
    %v152 = vunpack.c.l.b16 %v66
    %v153 = vunpack.c.h.b16 %v66
    %v154 = vunpack.c.l.b16 %v67
    %v155 = vunpack.c.h.b16 %v67
    %v156 = vunpack.c.l.b16 %v68
    %v157 = vunpack.c.h.b16 %v68
    %v158 = vunpack.c.l.b16 %v69
    %v159 = vunpack.c.h.b16 %v69
    %v160 = vunpack.c.l.b16 %v70
    %v161 = vunpack.c.h.b16 %v70
    %v162 = vunpack.c.l.b16 %v71
    %v163 = vunpack.c.h.b16 %v71
    %v164 = vunpack.c.l.b16 %v72
    %v165 = vunpack.c.h.b16 %v72
    %v166 = vunpack.c.l.b16 %v73
    %v167 = vunpack.c.h.b16 %v73
    %v168 = vunpack.c.l.b16 %v74
    %v169 = vunpack.c.h.b16 %v74
    %v170 = vunpack.c.l.b16 %v75
    %v171 = vunpack.c.h.b16 %v75
    %v172 = vpack.c.b16 %v112, %v108
    %v173 = vpack.c.b16 %v113, %v109
    %v174 = vpack.c.b16 %v114, %v110
    %v175 = vpack.c.b16 %v115, %v111
    %v176 = vpack.c.b16 %v120, %v116
    %v177 = vpack.c.b16 %v121, %v117
    %v178 = vpack.c.b16 %v122, %v118
    %v179 = vpack.c.b16 %v123, %v119
    %v180 = vpack.c.b16 %v128, %v124
    %v181 = vpack.c.b16 %v129, %v125
    %v182 = vpack.c.b16 %v130, %v126
    %v183 = vpack.c.b16 %v131, %v127
    %v184 = vpack.c.b16 %v136, %v132
    %v185 = vpack.c.b16 %v137, %v133
    %v186 = vpack.c.b16 %v138, %v134
    %v187 = vpack.c.b16 %v139, %v135
    %v188 = vpack.c.b16 %v144, %v140
    %v189 = vpack.c.b16 %v145, %v141
    %v190 = vpack.c.b16 %v146, %v142
    %v191 = vpack.c.b16 %v147, %v143
    %v192 = vpack.c.b16 %v152, %v148
    %v193 = vpack.c.b16 %v153, %v149
    %v194 = vpack.c.b16 %v154, %v150
    %v195 = vpack.c.b16 %v155, %v151
    %v196 = vpack.c.b16 %v160, %v156
    %v197 = vpack.c.b16 %v161, %v157
    %v198 = vpack.c.b16 %v162, %v158
    %v199 = vpack.c.b16 %v163, %v159
    %v200 = vpack.c.b16 %v168, %v164
    %v201 = vpack.c.b16 %v169, %v165
    %v202 = vpack.c.b16 %v170, %v166
    %v203 = vpack.c.b16 %v171, %v167
    %236 = vmatprep.subr.bf16.mxu0 %v201
    %237 = vmatpush1.bf16.msra.mxu0 %v200
    %238 = vmatprep.subr.bf16.mxu0 %v197
    %239 = vmatpush1.bf16.msra.mxu0 %v196
    %240 = vmatprep.subr.bf16.mxu0 %v193
    %241 = vmatpush1.bf16.msra.mxu0 %v192
    %242 = vmatprep.subr.bf16.mxu0 %v189
    %243 = vmatpush1.bf16.msra.mxu0 %v188
    %244 = vmatprep.subr.bf16.mxu0 %v185
    %245 = vmatpush1.bf16.msra.mxu0 %v184
    %246 = vmatprep.subr.bf16.mxu0 %v181
    %247 = vmatpush1.bf16.msra.mxu0 %v180
    %248 = vmatprep.subr.bf16.mxu0 %v177
    %249 = vmatpush1.bf16.msra.mxu0 %v176
    %250 = vmatprep.subr.bf16.mxu0 %v173
    %251 = vmatpush1.bf16.msra.mxu0 %v172
    %252 = vmatprep.subr.bf16.mxu0 0
    %253 = vmatpush2.bf16.msra.mxu0 0
    %254 = vmatprep.subr.bf16.mxu0 0
    %255 = vmatpush2.bf16.msra.mxu0 0
    %256 = vmatprep.subr.bf16.mxu0 0
    %257 = vmatpush2.bf16.msra.mxu0 0
    %258 = vmatprep.subr.bf16.mxu0 0
    %259 = vmatpush2.bf16.msra.mxu0 0
    %260 = vmatprep.subr.bf16.mxu0 0
    %261 = vmatpush2.bf16.msra.mxu0 0
    %262 = vmatprep.subr.bf16.mxu0 0
    %263 = vmatpush2.bf16.msra.mxu0 0
    %264 = vmatprep.subr.bf16.mxu0 0
    %265 = vmatpush2.bf16.msra.mxu0 0
    %266 = vmatprep.subr.bf16.mxu0 0
    %267 = vmatpush2.bf16.msra.mxu0 0
    %268 = vmatprep.mubr.bf16.mxu0 0
    %269 = vmatmul.mubr.bf16.gmra.mxu0 %v41
    %v270 = vpop.f32.mrf.mxu0
    %v271 = vadd.f32 0.0, %v270
    %v272 = vpop.f32.mrf.mxu0
    %v273 = vadd.f32 0.0, %v272
    %v274 = vpop.f32.mrf.mxu0
    %v275 = vadd.f32 0.0, %v274
    %v276 = vpop.f32.mrf.mxu0
    %v277 = vadd.f32 0.0, %v276
    %278 = vmatprep.mubr.bf16.mxu0 0
    %279 = vmatmul.mubr.bf16.gmra.mxu0 %v42
    %v280 = vpop.f32.mrf.mxu0
    %v281 = vadd.f32 0.0, %v280
    %v282 = vpop.f32.mrf.mxu0
    %v283 = vadd.f32 0.0, %v282
    %v284 = vpop.f32.mrf.mxu0
    %v285 = vadd.f32 0.0, %v284
    %v286 = vpop.f32.mrf.mxu0
    %v287 = vadd.f32 0.0, %v286
    %288 = vmatprep.mubr.bf16.mxu0 0
    %289 = vmatmul.mubr.bf16.gmra.mxu0 %v43
    %v290 = vpop.f32.mrf.mxu0
    %v291 = vpop.f32.mrf.mxu0
    %v292 = vpop.f32.mrf.mxu0
    %v293 = vpop.f32.mrf.mxu0
    %294 = vdwg.mxu0
    %295 = vmatprep.subr.bf16.mxu0 %v203
    %296 = vmatpush1.bf16.msra.mxu0 %v202
    %297 = vmatprep.subr.bf16.mxu0 %v199
    %298 = vmatpush1.bf16.msra.mxu0 %v198
    %299 = vmatprep.subr.bf16.mxu0 %v195
    %300 = vmatpush1.bf16.msra.mxu0 %v194
    %301 = vmatprep.subr.bf16.mxu0 %v191
    %302 = vmatpush1.bf16.msra.mxu0 %v190
    %303 = vmatprep.subr.bf16.mxu0 %v187
    %304 = vmatpush1.bf16.msra.mxu0 %v186
    %305 = vmatprep.subr.bf16.mxu0 %v183
    %306 = vmatpush1.bf16.msra.mxu0 %v182
    %307 = vmatprep.subr.bf16.mxu0 %v179
    %308 = vmatpush1.bf16.msra.mxu0 %v178
    %309 = vmatprep.subr.bf16.mxu0 %v175
    %310 = vmatpush1.bf16.msra.mxu0 %v174
    %311 = vmatprep.subr.bf16.mxu0 0
    %312 = vmatpush2.bf16.msra.mxu0 0
    %313 = vmatprep.subr.bf16.mxu0 0
    %314 = vmatpush2.bf16.msra.mxu0 0
    %315 = vmatprep.subr.bf16.mxu0 0
    %316 = vmatpush2.bf16.msra.mxu0 0
    %317 = vmatprep.subr.bf16.mxu0 0
    %318 = vmatpush2.bf16.msra.mxu0 0
    %319 = vmatprep.subr.bf16.mxu0 0
    %320 = vmatpush2.bf16.msra.mxu0 0
    %321 = vmatprep.subr.bf16.mxu0 0
    %322 = vmatpush2.bf16.msra.mxu0 0
    %323 = vmatprep.subr.bf16.mxu0 0
    %324 = vmatpush2.bf16.msra.mxu0 0
    %325 = vmatprep.subr.bf16.mxu0 0
    %326 = vmatpush2.bf16.msra.mxu0 0
    %327 = vmatprep.mubr.bf16.mxu0 0
    %328 = vmatmul.mubr.bf16.gmra.mxu0 %v41
    %v329 = vpop.f32.mrf.mxu0
    %v330 = vadd.f32 0.0, %v329
    %v331 = vpop.f32.mrf.mxu0
    %v332 = vadd.f32 0.0, %v331
    %v333 = vpop.f32.mrf.mxu0
    %v334 = vadd.f32 0.0, %v333
    %v335 = vpop.f32.mrf.mxu0
    %v336 = vadd.f32 0.0, %v335
    %337 = vmatprep.mubr.bf16.mxu0 0
    %338 = vmatmul.mubr.bf16.gmra.mxu0 %v42
    %v339 = vpop.f32.mrf.mxu0
    %v340 = vadd.f32 0.0, %v339
    %v341 = vpop.f32.mrf.mxu0
    %v342 = vadd.f32 0.0, %v341
    %v343 = vpop.f32.mrf.mxu0
    %v344 = vadd.f32 0.0, %v343
    %v345 = vpop.f32.mrf.mxu0
    %v346 = vadd.f32 0.0, %v345
    %347 = vmatprep.mubr.bf16.mxu0 0
    %348 = vmatmul.mubr.bf16.gmra.mxu0 %v43
    %v349 = vpop.f32.mrf.mxu0
    %v350 = vadd.f32 0.0, %v349
    %v351 = vpop.f32.mrf.mxu0
    %v352 = vadd.f32 0.0, %v351
    %v353 = vpop.f32.mrf.mxu0
    %v354 = vpop.f32.mrf.mxu0
    %355 = vdwg.mxu0
    %vm360 = vcmask 1045504
    %v361 = vrot.slane %v273, 2
    %v362 = vrot.slane %v277, 2
    %v363 = vsel %vm360, %v361, %v362
    %v364 = vrot.slane %v283, 2
    %v365 = vsel %vm360, %v362, %v364
    %v366 = vrot.slane %v287, 2
    %v367 = vsel %vm360, %v364, %v366
    %v372 = vadd.f32 %v271, %v363
    %v373 = vadd.f32 %v275, %v365
    %v374 = vadd.f32 %v281, %v367
    %v375 = vadd.f32 %v285, %v366
    %vm381 = vcmask 1043456
    %v382 = vrot.slane %v330, 4
    %v383 = vrot.slane %v334, 4
    %v384 = vsel %vm381, %v382, %v383
    %v385 = vrot.slane %v340, 4
    %v386 = vsel %vm381, %v383, %v385
    %v387 = vrot.slane %v344, 4
    %v388 = vsel %vm381, %v385, %v387
    %v389 = vrot.slane %v350, 4
    %v390 = vsel %vm381, %v387, %v389
    %v395 = vadd.f32 %v372, %v384
    %v396 = vadd.f32 %v373, %v386
    %v397 = vadd.f32 %v374, %v388
    %v398 = vadd.f32 %v375, %v390
    %vm404 = vcmask 1041408
    %v405 = vrot.slane %v332, 6
    %v406 = vrot.slane %v336, 6
    %v407 = vsel %vm404, %v405, %v406
    %v408 = vrot.slane %v342, 6
    %v409 = vsel %vm404, %v406, %v408
    %v410 = vrot.slane %v346, 6
    %v411 = vsel %vm404, %v408, %v410
    %v412 = vrot.slane %v352, 6
    %v413 = vsel %vm404, %v410, %v412
    %v418 = vadd.f32 %v395, %v407
    %v419 = vadd.f32 %v396, %v409
    %v420 = vadd.f32 %v397, %v411
    %v421 = vadd.f32 %v398, %v413
    %v422 = vld [vmem:[#allocation2] sm:$0xf]
    %v423 = vld [vmem:[#allocation2 + $0x4] sm:$0xf]
    %v424 = vld [vmem:[#allocation2 + $0x8] sm:$0xf]
    %v425 = vpack.c.bf16 %v419, %v418
    %v426 = vpack.c.bf16 %v421, %v420
    %v427 = vld [vmem:[%s3] sm:$0xff]
    %v428 = vld [vmem:[%s3 + $0x8] sm:$0xff]
    %v429 = vld [vmem:[%s3 + $0x10] sm:$0xff]
    %v433 = vunpack.c.l.b16 %v422
    %v434 = vunpack.c.l.b16 %v423
    %v435 = vunpack.c.l.b16 %v424
    %v436 = vpack.c.b16 %v434, %v433
    %v437 = vpack.c.b16 %v435, %v435
    %vm438 = vcmask 244736
    %v440 = vsel %vm438, %v436, 0
    %v443 = vsel %vm438, %v437, 0
    %vm445 = vcmask 1046528
    %v447 = vsel %vm445, %v426, 0
    %449 = vmatprep.subr.bf16.mxu0 0
    %450 = vmatpush1.bf16.msra.mxu0 0
    %451 = vmatprep.subr.bf16.mxu0 0
    %452 = vmatpush1.bf16.msra.mxu0 0
    %453 = vmatprep.subr.bf16.mxu0 0
    %454 = vmatpush1.bf16.msra.mxu0 0
    %455 = vmatprep.subr.bf16.mxu0 0
    %456 = vmatpush1.bf16.msra.mxu0 0
    %457 = vmatprep.subr.bf16.mxu0 0
    %458 = vmatpush1.bf16.msra.mxu0 0
    %459 = vmatprep.subr.bf16.mxu0 0
    %460 = vmatpush1.bf16.msra.mxu0 0
    %461 = vmatprep.subr.bf16.mxu0 0
    %462 = vmatpush1.bf16.msra.mxu0 %v447
    %463 = vmatprep.subr.bf16.mxu0 0
    %464 = vmatpush1.bf16.msra.mxu0 %v425
    %465 = vmatprep.subr.bf16.mxu0 0
    %466 = vmatpush2.bf16.msra.mxu0 0
    %467 = vmatprep.subr.bf16.mxu0 0
    %468 = vmatpush2.bf16.msra.mxu0 0
    %469 = vmatprep.subr.bf16.mxu0 0
    %470 = vmatpush2.bf16.msra.mxu0 0
    %471 = vmatprep.subr.bf16.mxu0 0
    %472 = vmatpush2.bf16.msra.mxu0 0
    %473 = vmatprep.subr.bf16.mxu0 0
    %474 = vmatpush2.bf16.msra.mxu0 0
    %475 = vmatprep.subr.bf16.mxu0 0
    %476 = vmatpush2.bf16.msra.mxu0 0
    %477 = vmatprep.subr.bf16.mxu0 0
    %478 = vmatpush2.bf16.msra.mxu0 0
    %479 = vmatprep.subr.bf16.mxu0 0
    %480 = vmatpush2.bf16.msra.mxu0 0
    %481 = vmatprep.mubr.bf16.mxu0 0
    %482 = vmatmul.mubr.bf16.gmra.mxu0 %v440
    %v483 = vpop.f32.mrf.mxu0
    %v484 = vadd.f32 %v427, %v483
    %v485 = vpop.f32.mrf.mxu0
    %v486 = vpop.f32.mrf.mxu0
    %v487 = vadd.f32 %v428, %v486
    %v488 = vpop.f32.mrf.mxu0
    %489 = vmatprep.mubr.bf16.mxu0 0
    %490 = vmatmul.mubr.bf16.gmra.mxu0 %v443
    %v491 = vpop.f32.mrf.mxu0
    %v492 = vadd.f32 %v429, %v491
    %v493 = vpop.f32.mrf.mxu0
    %v494 = vpop.f32.mrf.mxu0
    %v495 = vpop.f32.mrf.mxu0
    %496 = vdwg.mxu0
    %vm497 = vcmp.ge.f32.partialorder %v484, 0.0
    %vm498 = vcmp.ge.f32.partialorder %v487, 0.0
    %vm499 = vcmp.ge.f32.partialorder %v492, 0.0
    %v500 = vmul.f32 %v484, 0.2
    %v501 = vmul.f32 %v487, 0.2
    %v502 = vmul.f32 %v492, 0.2
    %v503 = vsel %vm497, %v484, %v500
    %v504 = vsel %vm498, %v487, %v501
    %v505 = vsel %vm499, %v492, %v502
    %v506 = vpack.c.bf16 %v504, %v503
    %v507 = vpack.c.bf16 %v505, %v505
    %s508 = scalar_lea.vmem %s1, 256
    %v509 = vld [vmem:[%s508] sm:$0xff]
    %v510 = vld [vmem:[%s508 + $0x8] sm:$0xff]
    %v511 = vld [vmem:[%s508 + $0x10] sm:$0xff]
    %v512 = vld [vmem:[%s508 + $0x18] sm:$0xff]
    %v513 = vld [vmem:[%s508 + $0x20] sm:$0xff]
    %v514 = vld [vmem:[%s508 + $0x28] sm:$0xff]
    %v515 = vld [vmem:[%s508 + $0x30] sm:$0xff]
    %v516 = vld [vmem:[%s508 + $0x38] sm:$0xff]
    %v517 = vld [vmem:[%s508 + $0x40] sm:$0xff]
    %v518 = vld [vmem:[%s508 + $0x48] sm:$0xff]
    %v519 = vld [vmem:[%s508 + $0x50] sm:$0xff]
    %v520 = vld [vmem:[%s508 + $0x58] sm:$0xff]
    %v521 = vld [vmem:[%s508 + $0x60] sm:$0xff]
    %v522 = vld [vmem:[%s508 + $0x68] sm:$0xff]
    %v523 = vld [vmem:[%s508 + $0x70] sm:$0xff]
    %v524 = vld [vmem:[%s508 + $0x78] sm:$0xff]
    %v525 = vld [vmem:[%s508 + $0x80] sm:$0xff]
    %v526 = vld [vmem:[%s508 + $0x88] sm:$0xff]
    %v527 = vld [vmem:[%s508 + $0x90] sm:$0xff]
    %v528 = vld [vmem:[%s508 + $0x98] sm:$0xff]
    %v529 = vld [vmem:[%s508 + $0xa0] sm:$0xff]
    %v530 = vld [vmem:[%s508 + $0xa8] sm:$0xff]
    %v531 = vld [vmem:[%s508 + $0xb0] sm:$0xff]
    %v532 = vld [vmem:[%s508 + $0xb8] sm:$0xff]
    %v533 = vld [vmem:[%s508 + $0xc0] sm:$0xff]
    %v534 = vld [vmem:[%s508 + $0xc8] sm:$0xff]
    %v535 = vld [vmem:[%s508 + $0xd0] sm:$0xff]
    %v536 = vld [vmem:[%s508 + $0xd8] sm:$0xff]
    %v537 = vld [vmem:[%s508 + $0xe0] sm:$0xff]
    %v538 = vld [vmem:[%s508 + $0xe8] sm:$0xff]
    %v539 = vld [vmem:[%s508 + $0xf0] sm:$0xff]
    %v540 = vld [vmem:[%s508 + $0xf8] sm:$0xff]
    %v573 = vunpack.c.l.b16 %v509
    %v574 = vunpack.c.h.b16 %v509
    %v575 = vunpack.c.l.b16 %v510
    %v576 = vunpack.c.h.b16 %v510
    %v577 = vunpack.c.l.b16 %v511
    %v578 = vunpack.c.h.b16 %v511
    %v579 = vunpack.c.l.b16 %v512
    %v580 = vunpack.c.h.b16 %v512
    %v581 = vunpack.c.l.b16 %v513
    %v582 = vunpack.c.h.b16 %v513
    %v583 = vunpack.c.l.b16 %v514
    %v584 = vunpack.c.h.b16 %v514
    %v585 = vunpack.c.l.b16 %v515
    %v586 = vunpack.c.h.b16 %v515
    %v587 = vunpack.c.l.b16 %v516
    %v588 = vunpack.c.h.b16 %v516
    %v589 = vunpack.c.l.b16 %v517
    %v590 = vunpack.c.h.b16 %v517
    %v591 = vunpack.c.l.b16 %v518
    %v592 = vunpack.c.h.b16 %v518
    %v593 = vunpack.c.l.b16 %v519
    %v594 = vunpack.c.h.b16 %v519
    %v595 = vunpack.c.l.b16 %v520
    %v596 = vunpack.c.h.b16 %v520
    %v597 = vunpack.c.l.b16 %v521
    %v598 = vunpack.c.h.b16 %v521
    %v599 = vunpack.c.l.b16 %v522
    %v600 = vunpack.c.h.b16 %v522
    %v601 = vunpack.c.l.b16 %v523
    %v602 = vunpack.c.h.b16 %v523
    %v603 = vunpack.c.l.b16 %v524
    %v604 = vunpack.c.h.b16 %v524
    %v605 = vunpack.c.l.b16 %v525
    %v606 = vunpack.c.h.b16 %v525
    %v607 = vunpack.c.l.b16 %v526
    %v608 = vunpack.c.h.b16 %v526
    %v609 = vunpack.c.l.b16 %v527
    %v610 = vunpack.c.h.b16 %v527
    %v611 = vunpack.c.l.b16 %v528
    %v612 = vunpack.c.h.b16 %v528
    %v613 = vunpack.c.l.b16 %v529
    %v614 = vunpack.c.h.b16 %v529
    %v615 = vunpack.c.l.b16 %v530
    %v616 = vunpack.c.h.b16 %v530
    %v617 = vunpack.c.l.b16 %v531
    %v618 = vunpack.c.h.b16 %v531
    %v619 = vunpack.c.l.b16 %v532
    %v620 = vunpack.c.h.b16 %v532
    %v621 = vunpack.c.l.b16 %v533
    %v622 = vunpack.c.h.b16 %v533
    %v623 = vunpack.c.l.b16 %v534
    %v624 = vunpack.c.h.b16 %v534
    %v625 = vunpack.c.l.b16 %v535
    %v626 = vunpack.c.h.b16 %v535
    %v627 = vunpack.c.l.b16 %v536
    %v628 = vunpack.c.h.b16 %v536
    %v629 = vunpack.c.l.b16 %v537
    %v630 = vunpack.c.h.b16 %v537
    %v631 = vunpack.c.l.b16 %v538
    %v632 = vunpack.c.h.b16 %v538
    %v633 = vunpack.c.l.b16 %v539
    %v634 = vunpack.c.h.b16 %v539
    %v635 = vunpack.c.l.b16 %v540
    %v636 = vunpack.c.h.b16 %v540
    %v637 = vpack.c.b16 %v577, %v573
    %v638 = vpack.c.b16 %v578, %v574
    %v639 = vpack.c.b16 %v579, %v575
    %v640 = vpack.c.b16 %v580, %v576
    %v641 = vpack.c.b16 %v585, %v581
    %v642 = vpack.c.b16 %v586, %v582
    %v643 = vpack.c.b16 %v587, %v583
    %v644 = vpack.c.b16 %v588, %v584
    %v645 = vpack.c.b16 %v593, %v589
    %v646 = vpack.c.b16 %v594, %v590
    %v647 = vpack.c.b16 %v595, %v591
    %v648 = vpack.c.b16 %v596, %v592
    %v649 = vpack.c.b16 %v601, %v597
    %v650 = vpack.c.b16 %v602, %v598
    %v651 = vpack.c.b16 %v603, %v599
    %v652 = vpack.c.b16 %v604, %v600
    %v653 = vpack.c.b16 %v609, %v605
    %v654 = vpack.c.b16 %v610, %v606
    %v655 = vpack.c.b16 %v611, %v607
    %v656 = vpack.c.b16 %v612, %v608
    %v657 = vpack.c.b16 %v617, %v613
    %v658 = vpack.c.b16 %v618, %v614
    %v659 = vpack.c.b16 %v619, %v615
    %v660 = vpack.c.b16 %v620, %v616
    %v661 = vpack.c.b16 %v625, %v621
    %v662 = vpack.c.b16 %v626, %v622
    %v663 = vpack.c.b16 %v627, %v623
    %v664 = vpack.c.b16 %v628, %v624
    %v665 = vpack.c.b16 %v633, %v629
    %v666 = vpack.c.b16 %v634, %v630
    %v667 = vpack.c.b16 %v635, %v631
    %v668 = vpack.c.b16 %v636, %v632
    %701 = vmatprep.subr.bf16.mxu0 %v666
    %702 = vmatpush1.bf16.msra.mxu0 %v665
    %703 = vmatprep.subr.bf16.mxu0 %v662
    %704 = vmatpush1.bf16.msra.mxu0 %v661
    %705 = vmatprep.subr.bf16.mxu0 %v658
    %706 = vmatpush1.bf16.msra.mxu0 %v657
    %707 = vmatprep.subr.bf16.mxu0 %v654
    %708 = vmatpush1.bf16.msra.mxu0 %v653
    %709 = vmatprep.subr.bf16.mxu0 %v650
    %710 = vmatpush1.bf16.msra.mxu0 %v649
    %711 = vmatprep.subr.bf16.mxu0 %v646
    %712 = vmatpush1.bf16.msra.mxu0 %v645
    %713 = vmatprep.subr.bf16.mxu0 %v642
    %714 = vmatpush1.bf16.msra.mxu0 %v641
    %715 = vmatprep.subr.bf16.mxu0 %v638
    %716 = vmatpush1.bf16.msra.mxu0 %v637
    %717 = vmatprep.subr.bf16.mxu0 0
    %718 = vmatpush2.bf16.msra.mxu0 0
    %719 = vmatprep.subr.bf16.mxu0 0
    %720 = vmatpush2.bf16.msra.mxu0 0
    %721 = vmatprep.subr.bf16.mxu0 0
    %722 = vmatpush2.bf16.msra.mxu0 0
    %723 = vmatprep.subr.bf16.mxu0 0
    %724 = vmatpush2.bf16.msra.mxu0 0
    %725 = vmatprep.subr.bf16.mxu0 0
    %726 = vmatpush2.bf16.msra.mxu0 0
    %727 = vmatprep.subr.bf16.mxu0 0
    %728 = vmatpush2.bf16.msra.mxu0 0
    %729 = vmatprep.subr.bf16.mxu0 0
    %730 = vmatpush2.bf16.msra.mxu0 0
    %731 = vmatprep.subr.bf16.mxu0 0
    %732 = vmatpush2.bf16.msra.mxu0 0
    %733 = vmatprep.mubr.bf16.mxu0 0
    %734 = vmatmul.mubr.bf16.gmra.mxu0 %v506
    %v735 = vpop.f32.mrf.mxu0
    %v736 = vadd.f32 0.0, %v735
    %v737 = vpop.f32.mrf.mxu0
    %v738 = vadd.f32 0.0, %v737
    %v739 = vpop.f32.mrf.mxu0
    %v740 = vadd.f32 0.0, %v739
    %v741 = vpop.f32.mrf.mxu0
    %v742 = vadd.f32 0.0, %v741
    %743 = vmatprep.mubr.bf16.mxu0 0
    %744 = vmatmul.mubr.bf16.gmra.mxu0 %v507
    %v745 = vpop.f32.mrf.mxu0
    %v746 = vpop.f32.mrf.mxu0
    %v747 = vpop.f32.mrf.mxu0
    %v748 = vpop.f32.mrf.mxu0
    %749 = vdwg.mxu0
    %750 = vmatprep.subr.bf16.mxu0 %v668
    %751 = vmatpush1.bf16.msra.mxu0 %v667
    %752 = vmatprep.subr.bf16.mxu0 %v664
    %753 = vmatpush1.bf16.msra.mxu0 %v663
    %754 = vmatprep.subr.bf16.mxu0 %v660
    %755 = vmatpush1.bf16.msra.mxu0 %v659
    %756 = vmatprep.subr.bf16.mxu0 %v656
    %757 = vmatpush1.bf16.msra.mxu0 %v655
    %758 = vmatprep.subr.bf16.mxu0 %v652
    %759 = vmatpush1.bf16.msra.mxu0 %v651
    %760 = vmatprep.subr.bf16.mxu0 %v648
    %761 = vmatpush1.bf16.msra.mxu0 %v647
    %762 = vmatprep.subr.bf16.mxu0 %v644
    %763 = vmatpush1.bf16.msra.mxu0 %v643
    %764 = vmatprep.subr.bf16.mxu0 %v640
    %765 = vmatpush1.bf16.msra.mxu0 %v639
    %766 = vmatprep.subr.bf16.mxu0 0
    %767 = vmatpush2.bf16.msra.mxu0 0
    %768 = vmatprep.subr.bf16.mxu0 0
    %769 = vmatpush2.bf16.msra.mxu0 0
    %770 = vmatprep.subr.bf16.mxu0 0
    %771 = vmatpush2.bf16.msra.mxu0 0
    %772 = vmatprep.subr.bf16.mxu0 0
    %773 = vmatpush2.bf16.msra.mxu0 0
    %774 = vmatprep.subr.bf16.mxu0 0
    %775 = vmatpush2.bf16.msra.mxu0 0
    %776 = vmatprep.subr.bf16.mxu0 0
    %777 = vmatpush2.bf16.msra.mxu0 0
    %778 = vmatprep.subr.bf16.mxu0 0
    %779 = vmatpush2.bf16.msra.mxu0 0
    %780 = vmatprep.subr.bf16.mxu0 0
    %781 = vmatpush2.bf16.msra.mxu0 0
    %782 = vmatprep.mubr.bf16.mxu0 0
    %783 = vmatmul.mubr.bf16.gmra.mxu0 %v506
    %v784 = vpop.f32.mrf.mxu0
    %v785 = vadd.f32 0.0, %v784
    %v786 = vpop.f32.mrf.mxu0
    %v787 = vadd.f32 0.0, %v786
    %v788 = vpop.f32.mrf.mxu0
    %v789 = vadd.f32 0.0, %v788
    %v790 = vpop.f32.mrf.mxu0
    %v791 = vadd.f32 0.0, %v790
    %792 = vmatprep.mubr.bf16.mxu0 0
    %793 = vmatmul.mubr.bf16.gmra.mxu0 %v507
    %v794 = vpop.f32.mrf.mxu0
    %v795 = vadd.f32 0.0, %v794
    %v796 = vpop.f32.mrf.mxu0
    %v797 = vadd.f32 0.0, %v796
    %v798 = vpop.f32.mrf.mxu0
    %v799 = vpop.f32.mrf.mxu0
    %800 = vdwg.mxu0
    %v803 = vrot.slane %v738, 2
    %v804 = vrot.slane %v742, 2
    %v805 = vsel %vm360, %v803, %v804
    %v808 = vadd.f32 %v736, %v805
    %v809 = vadd.f32 %v740, %v804
    %v813 = vrot.slane %v785, 4
    %v814 = vrot.slane %v789, 4
    %v815 = vsel %vm381, %v813, %v814
    %v816 = vrot.slane %v795, 4
    %v817 = vsel %vm381, %v814, %v816
    %v820 = vadd.f32 %v808, %v815
    %v821 = vadd.f32 %v809, %v817
    %v825 = vrot.slane %v787, 6
    %v826 = vrot.slane %v791, 6
    %v827 = vsel %vm404, %v825, %v826
    %v828 = vrot.slane %v797, 6
    %v829 = vsel %vm404, %v826, %v828
    %v832 = vadd.f32 %v820, %v827
    %v833 = vadd.f32 %v821, %v829
    %s834 = scalar_lea.vmem [#allocation2], 12
    %v835 = vld [vmem:[%s834] sm:$0xf]
    %v836 = vld [vmem:[%s834 + $0x4] sm:$0xf]
    %v837 = vpack.c.bf16 %v833, %v832
    %s838 = scalar_lea.vmem %s3, 48
    %v839 = vld [vmem:[%s838] sm:$0xff]
    %v840 = vld [vmem:[%s838 + $0x8] sm:$0xff]
    %v843 = vunpack.c.l.b16 %v835
    %v844 = vunpack.c.l.b16 %v836
    %v845 = vpack.c.b16 %v844, %v843
    %vm846 = vcmask 113664
    %v848 = vsel %vm846, %v845, 0
    %v851 = vsel %vm445, %v837, 0
    %853 = vmatprep.subr.bf16.mxu0 0
    %854 = vmatpush1.bf16.msra.mxu0 0
    %855 = vmatprep.subr.bf16.mxu0 0
    %856 = vmatpush1.bf16.msra.mxu0 0
    %857 = vmatprep.subr.bf16.mxu0 0
    %858 = vmatpush1.bf16.msra.mxu0 0
    %859 = vmatprep.subr.bf16.mxu0 0
    %860 = vmatpush1.bf16.msra.mxu0 0
    %861 = vmatprep.subr.bf16.mxu0 0
    %862 = vmatpush1.bf16.msra.mxu0 0
    %863 = vmatprep.subr.bf16.mxu0 0
    %864 = vmatpush1.bf16.msra.mxu0 0
    %865 = vmatprep.subr.bf16.mxu0 0
    %866 = vmatpush1.bf16.msra.mxu0 0
    %867 = vmatprep.subr.bf16.mxu0 0
    %868 = vmatpush1.bf16.msra.mxu0 %v851
    %869 = vmatprep.subr.bf16.mxu0 0
    %870 = vmatpush2.bf16.msra.mxu0 0
    %871 = vmatprep.subr.bf16.mxu0 0
    %872 = vmatpush2.bf16.msra.mxu0 0
    %873 = vmatprep.subr.bf16.mxu0 0
    %874 = vmatpush2.bf16.msra.mxu0 0
    %875 = vmatprep.subr.bf16.mxu0 0
    %876 = vmatpush2.bf16.msra.mxu0 0
    %877 = vmatprep.subr.bf16.mxu0 0
    %878 = vmatpush2.bf16.msra.mxu0 0
    %879 = vmatprep.subr.bf16.mxu0 0
    %880 = vmatpush2.bf16.msra.mxu0 0
    %881 = vmatprep.subr.bf16.mxu0 0
    %882 = vmatpush2.bf16.msra.mxu0 0
    %883 = vmatprep.subr.bf16.mxu0 0
    %884 = vmatpush2.bf16.msra.mxu0 0
    %885 = vmatprep.mubr.bf16.mxu0 0
    %886 = vmatmul.mubr.bf16.gmra.mxu0 %v848
    %v887 = vpop.f32.mrf.mxu0
    %v888 = vadd.f32 %v839, %v887
    %v889 = vpop.f32.mrf.mxu0
    %v890 = vpop.f32.mrf.mxu0
    %v891 = vadd.f32 %v840, %v890
    %v892 = vpop.f32.mrf.mxu0
    %893 = vdwg.mxu0
    %v894 = vld [vmem:[%s4] sm:$0xff]
    %v895 = vld [vmem:[%s4 + $0x8] sm:$0xff]
    %v896 = vld [vmem:[%s4 + $0x10] sm:$0xff]
    %v897 = vld [vmem:[%s4 + $0x18] sm:$0xff]
    %v898 = vld [vmem:[%s4 + $0x20] sm:$0xff]
    %v899 = vld [vmem:[%s4 + $0x28] sm:$0xff]
    %v900 = vld [vmem:[%s4 + $0x30] sm:$0xff]
    %v901 = vld [vmem:[%s4 + $0x38] sm:$0xff]
    %v902 = vld [vmem:[%s4 + $0x40] sm:$0xff]
    %v903 = vld [vmem:[%s4 + $0x48] sm:$0xff]
    %v904 = vld [vmem:[%s4 + $0x50] sm:$0xff]
    %v905 = vld [vmem:[%s4 + $0x58] sm:$0xff]
    %v906 = vld [vmem:[%s4 + $0x60] sm:$0xff]
    %v907 = vld [vmem:[%s4 + $0x68] sm:$0xff]
    %v908 = vld [vmem:[%s4 + $0x70] sm:$0xff]
    %v909 = vld [vmem:[%s4 + $0x78] sm:$0xff]
    %s910 = scalar_lea.vmem %s4, 128
    %v911 = vld [vmem:[%s910] sm:$0xff]
    %v912 = vld [vmem:[%s910 + $0x8] sm:$0xff]
    %v913 = vld [vmem:[%s910 + $0x10] sm:$0xff]
    %v914 = vld [vmem:[%s910 + $0x18] sm:$0xff]
    %v915 = vld [vmem:[%s910 + $0x20] sm:$0xff]
    %v916 = vld [vmem:[%s910 + $0x28] sm:$0xff]
    %v917 = vld [vmem:[%s910 + $0x30] sm:$0xff]
    %v918 = vld [vmem:[%s910 + $0x38] sm:$0xff]
    %v919 = vld [vmem:[%s910 + $0x40] sm:$0xff]
    %v920 = vld [vmem:[%s910 + $0x48] sm:$0xff]
    %v921 = vld [vmem:[%s910 + $0x50] sm:$0xff]
    %v922 = vld [vmem:[%s910 + $0x58] sm:$0xff]
    %v923 = vld [vmem:[%s910 + $0x60] sm:$0xff]
    %v924 = vld [vmem:[%s910 + $0x68] sm:$0xff]
    %v925 = vld [vmem:[%s910 + $0x70] sm:$0xff]
    %v926 = vld [vmem:[%s910 + $0x78] sm:$0xff]
    %v927 = vsel %vm381, %v891, 0.0
    %v928 = vadd.f32 %v888, %v927
    %v929 = vrot.slane %v928, 4
    %v930 = vadd.f32 %v928, %v929
    %v931 = vrot.slane %v930, 2
    %v932 = vadd.f32 %v930, %v931
    %v933 = vrot.slane %v932, 1
    %v934 = vadd.f32 %v932, %v933
    %v935 = vmul.f32 %v888, %v888
    %v936 = vmul.f32 %v891, %v891
    %v937 = vsel %vm381, %v936, 0.0
    %v938 = vadd.f32 %v935, %v937
    %v939 = vrot.slane %v938, 4
    %v940 = vadd.f32 %v938, %v939
    %v941 = vrot.slane %v940, 2
    %v942 = vadd.f32 %v940, %v941
    %v943 = vrot.slane %v942, 1
    %v944 = vadd.f32 %v942, %v943
    %vm945 = vcmask 1040384
    %v946 = vsel %vm945, %v934, %v944
    %947 = vmatprep.subr.mxu0 0.0
    %948 = vmatpush1.msra.mxu0 %v909
    %949 = vmatprep.subr.mxu0 0.0
    %950 = vmatpush1.msra.mxu0 %v908
    %951 = vmatprep.subr.mxu0 0.0
    %952 = vmatpush1.msra.mxu0 %v907
    %953 = vmatprep.subr.mxu0 0.0
    %954 = vmatpush1.msra.mxu0 %v906
    %955 = vmatprep.subr.mxu0 0.0
    %956 = vmatpush1.msra.mxu0 %v905
    %957 = vmatprep.subr.mxu0 0.0
    %958 = vmatpush1.msra.mxu0 %v904
    %959 = vmatprep.subr.mxu0 0.0
    %960 = vmatpush1.msra.mxu0 %v903
    %961 = vmatprep.subr.mxu0 0.0
    %962 = vmatpush1.msra.mxu0 %v902
    %963 = vmatprep.subr.mxu0 0.0
    %964 = vmatpush1.msra.mxu0 %v901
    %965 = vmatprep.subr.mxu0 0.0
    %966 = vmatpush1.msra.mxu0 %v900
    %967 = vmatprep.subr.mxu0 0.0
    %968 = vmatpush1.msra.mxu0 %v899
    %969 = vmatprep.subr.mxu0 0.0
    %970 = vmatpush1.msra.mxu0 %v898
    %971 = vmatprep.subr.mxu0 0.0
    %972 = vmatpush1.msra.mxu0 %v897
    %973 = vmatprep.subr.mxu0 0.0
    %974 = vmatpush1.msra.mxu0 %v896
    %975 = vmatprep.subr.mxu0 0.0
    %976 = vmatpush1.msra.mxu0 %v895
    %977 = vmatprep.subr.mxu0 0.0
    %978 = vmatpush1.msra.mxu0 %v894
    %979 = vmatprep.subr.mxu0 0.0
    %980 = vmatpush2.msra.mxu0 0.0
    %981 = vmatprep.subr.mxu0 0.0
    %982 = vmatpush2.msra.mxu0 0.0
    %983 = vmatprep.subr.mxu0 0.0
    %984 = vmatpush2.msra.mxu0 0.0
    %985 = vmatprep.subr.mxu0 0.0
    %986 = vmatpush2.msra.mxu0 0.0
    %987 = vmatprep.subr.mxu0 0.0
    %988 = vmatpush2.msra.mxu0 0.0
    %989 = vmatprep.subr.mxu0 0.0
    %990 = vmatpush2.msra.mxu0 0.0
    %991 = vmatprep.subr.mxu0 0.0
    %992 = vmatpush2.msra.mxu0 0.0
    %993 = vmatprep.subr.mxu0 0.0
    %994 = vmatpush2.msra.mxu0 0.0
    %995 = vmatprep.subr.mxu0 0.0
    %996 = vmatpush2.msra.mxu0 0.0
    %997 = vmatprep.subr.mxu0 0.0
    %998 = vmatpush2.msra.mxu0 0.0
    %999 = vmatprep.subr.mxu0 0.0
    %1000 = vmatpush2.msra.mxu0 0.0
    %1001 = vmatprep.subr.mxu0 0.0
    %1002 = vmatpush2.msra.mxu0 0.0
    %1003 = vmatprep.subr.mxu0 0.0
    %1004 = vmatpush2.msra.mxu0 0.0
    %1005 = vmatprep.subr.mxu0 0.0
    %1006 = vmatpush2.msra.mxu0 0.0
    %1007 = vmatprep.subr.mxu0 0.0
    %1008 = vmatpush2.msra.mxu0 0.0
    %1009 = vmatprep.subr.mxu0 0.0
    %1010 = vmatpush2.msra.mxu0 0.0
    %1011 = vmatprep.mubr.f32.mxu0 0.0
    %1012 = vmatmul.mubr.f32.gmra.mxu0 %v946
    %v1013 = vpop.f32.mrf.mxu0
    %v1014 = vadd.f32 0.0, %v1013
    %v1015 = vpop.f32.mrf.mxu0
    %1016 = vdwg.mxu0
    %v1017 = vmul.f32 %v1014, 0.03125
    %v1018 = vmul.f32 %v1017, %v1017
    %v1020 = vrot.slane %v1018, 7
    %v1022 = vsub.f32 %v1017, %v1020
    %v1023 = vadd.f32 %v1022, 1e-05
    %v1024 = vrsqrt.pop %v1023
    %s1025 = scalar_lea.vmem %s3, 240
    %v1026 = vld [vmem:[%s1025] sm:$0xff]
    %v1028 = vrot.slane %v1024, 1
    %v1030 = vmul.f32 %v1026, %v1028
    %v1031 = vmul.f32 %v1017, %v1030
    %v1033 = vrot.slane %v1031, 7
    %v1035 = vsub.f32 %v1026, %v1033
    %v1036 = vsel %vm945, %v1030, %v1035
    %1037 = vmatprep.subr.mxu0 0.0
    %1038 = vmatpush1.msra.mxu0 %v926
    %1039 = vmatprep.subr.mxu0 0.0
    %1040 = vmatpush1.msra.mxu0 %v925
    %1041 = vmatprep.subr.mxu0 0.0
    %1042 = vmatpush1.msra.mxu0 %v924
    %1043 = vmatprep.subr.mxu0 0.0
    %1044 = vmatpush1.msra.mxu0 %v923
    %1045 = vmatprep.subr.mxu0 0.0
    %1046 = vmatpush1.msra.mxu0 %v922
    %1047 = vmatprep.subr.mxu0 0.0
    %1048 = vmatpush1.msra.mxu0 %v921
    %1049 = vmatprep.subr.mxu0 0.0
    %1050 = vmatpush1.msra.mxu0 %v920
    %1051 = vmatprep.subr.mxu0 0.0
    %1052 = vmatpush1.msra.mxu0 %v919
    %1053 = vmatprep.subr.mxu0 0.0
    %1054 = vmatpush1.msra.mxu0 %v918
    %1055 = vmatprep.subr.mxu0 0.0
    %1056 = vmatpush1.msra.mxu0 %v917
    %1057 = vmatprep.subr.mxu0 0.0
    %1058 = vmatpush1.msra.mxu0 %v916
    %1059 = vmatprep.subr.mxu0 0.0
    %1060 = vmatpush1.msra.mxu0 %v915
    %1061 = vmatprep.subr.mxu0 0.0
    %1062 = vmatpush1.msra.mxu0 %v914
    %1063 = vmatprep.subr.mxu0 0.0
    %1064 = vmatpush1.msra.mxu0 %v913
    %1065 = vmatprep.subr.mxu0 0.0
    %1066 = vmatpush1.msra.mxu0 %v912
    %1067 = vmatprep.subr.mxu0 0.0
    %1068 = vmatpush1.msra.mxu0 %v911
    %1069 = vmatprep.subr.mxu0 0.0
    %1070 = vmatpush2.msra.mxu0 0.0
    %1071 = vmatprep.subr.mxu0 0.0
    %1072 = vmatpush2.msra.mxu0 0.0
    %1073 = vmatprep.subr.mxu0 0.0
    %1074 = vmatpush2.msra.mxu0 0.0
    %1075 = vmatprep.subr.mxu0 0.0
    %1076 = vmatpush2.msra.mxu0 0.0
    %1077 = vmatprep.subr.mxu0 0.0
    %1078 = vmatpush2.msra.mxu0 0.0
    %1079 = vmatprep.subr.mxu0 0.0
    %1080 = vmatpush2.msra.mxu0 0.0
    %1081 = vmatprep.subr.mxu0 0.0
    %1082 = vmatpush2.msra.mxu0 0.0
    %1083 = vmatprep.subr.mxu0 0.0
    %1084 = vmatpush2.msra.mxu0 0.0
    %1085 = vmatprep.subr.mxu0 0.0
    %1086 = vmatpush2.msra.mxu0 0.0
    %1087 = vmatprep.subr.mxu0 0.0
    %1088 = vmatpush2.msra.mxu0 0.0
    %1089 = vmatprep.subr.mxu0 0.0
    %1090 = vmatpush2.msra.mxu0 0.0
    %1091 = vmatprep.subr.mxu0 0.0
    %1092 = vmatpush2.msra.mxu0 0.0
    %1093 = vmatprep.subr.mxu0 0.0
    %1094 = vmatpush2.msra.mxu0 0.0
    %1095 = vmatprep.subr.mxu0 0.0
    %1096 = vmatpush2.msra.mxu0 0.0
    %1097 = vmatprep.subr.mxu0 0.0
    %1098 = vmatpush2.msra.mxu0 0.0
    %1099 = vmatprep.subr.mxu0 0.0
    %1100 = vmatpush2.msra.mxu0 0.0
    %1101 = vmatprep.mubr.f32.mxu0 0.0
    %1102 = vmatmul.mubr.f32.gmra.mxu0 %v1036
    %v1103 = vpop.f32.mrf.mxu0
    %v1104 = vadd.f32 0.0, %v1103
    %v1105 = vpop.f32.mrf.mxu0
    %1106 = vdwg.mxu0
    %v1107 = vlaneseq
    %v1108 = vshrl.u32 %v1107, 7
    %v1109 = vsub.s32 0, %v1108
    %v1110 = vrot.slane %v1104, %v1109
    %v1111 = vmul.f32 %v888, %v1110
    %v1112 = vmul.f32 %v891, %v1110
    %v1113 = vlaneseq
    %v1114 = vshrl.u32 %v1113, 7
    %v1115 = vsub.s32 1, %v1114
    %v1116 = vrot.slane %v1104, %v1115
    %v1117 = vadd.f32 %v1111, %v1116
    %v1118 = vadd.f32 %v1112, %v1116
    %vm1119 = vcmp.ge.f32.partialorder %v1117, 0.0
    %vm1120 = vcmp.ge.f32.partialorder %v1118, 0.0
    %v1121 = vmul.f32 %v1117, 0.2
    %v1122 = vmul.f32 %v1118, 0.2
    %v1123 = vsel %vm1119, %v1117, %v1121
    %v1124 = vsel %vm1120, %v1118, %v1122
    %s1125 = scalar_lea.vmem %s3, 72
    %v1126 = vld [vmem:[%s1125] sm:$0xff]
    %v1127 = vld [vmem:[%s1125 + $0x8] sm:$0xff]
    %v1128 = vmul.f32 %v1123, %v1126
    %v1129 = vmul.f32 %v1124, %v1127
    %v1130 = vpack.c.bf16 %v1129, %v1128
    %s1131 = scalar_lea.vmem %s1, 512
    %v1132 = vld [vmem:[%s1131] sm:$0xff]
    %v1133 = vld [vmem:[%s1131 + $0x8] sm:$0xff]
    %v1134 = vld [vmem:[%s1131 + $0x10] sm:$0xff]
    %v1135 = vld [vmem:[%s1131 + $0x18] sm:$0xff]
    %v1136 = vld [vmem:[%s1131 + $0x20] sm:$0xff]
    %v1137 = vld [vmem:[%s1131 + $0x28] sm:$0xff]
    %v1138 = vld [vmem:[%s1131 + $0x30] sm:$0xff]
    %v1139 = vld [vmem:[%s1131 + $0x38] sm:$0xff]
    %v1140 = vld [vmem:[%s1131 + $0x40] sm:$0xff]
    %v1141 = vld [vmem:[%s1131 + $0x48] sm:$0xff]
    %v1142 = vld [vmem:[%s1131 + $0x50] sm:$0xff]
    %v1143 = vld [vmem:[%s1131 + $0x58] sm:$0xff]
    %v1144 = vld [vmem:[%s1131 + $0x60] sm:$0xff]
    %v1145 = vld [vmem:[%s1131 + $0x68] sm:$0xff]
    %v1146 = vld [vmem:[%s1131 + $0x70] sm:$0xff]
    %v1147 = vld [vmem:[%s1131 + $0x78] sm:$0xff]
    %v1148 = vld [vmem:[%s1131 + $0x80] sm:$0xff]
    %v1149 = vld [vmem:[%s1131 + $0x88] sm:$0xff]
    %v1150 = vld [vmem:[%s1131 + $0x90] sm:$0xff]
    %v1151 = vld [vmem:[%s1131 + $0x98] sm:$0xff]
    %v1152 = vld [vmem:[%s1131 + $0xa0] sm:$0xff]
    %v1153 = vld [vmem:[%s1131 + $0xa8] sm:$0xff]
    %v1154 = vld [vmem:[%s1131 + $0xb0] sm:$0xff]
    %v1155 = vld [vmem:[%s1131 + $0xb8] sm:$0xff]
    %v1156 = vld [vmem:[%s1131 + $0xc0] sm:$0xff]
    %v1157 = vld [vmem:[%s1131 + $0xc8] sm:$0xff]
    %v1158 = vld [vmem:[%s1131 + $0xd0] sm:$0xff]
    %v1159 = vld [vmem:[%s1131 + $0xd8] sm:$0xff]
    %v1160 = vld [vmem:[%s1131 + $0xe0] sm:$0xff]
    %v1161 = vld [vmem:[%s1131 + $0xe8] sm:$0xff]
    %v1162 = vld [vmem:[%s1131 + $0xf0] sm:$0xff]
    %v1163 = vld [vmem:[%s1131 + $0xf8] sm:$0xff]
    %v1196 = vunpack.c.l.b16 %v1132
    %v1197 = vunpack.c.h.b16 %v1132
    %v1198 = vunpack.c.l.b16 %v1133
    %v1199 = vunpack.c.h.b16 %v1133
    %v1200 = vunpack.c.l.b16 %v1134
    %v1201 = vunpack.c.h.b16 %v1134
    %v1202 = vunpack.c.l.b16 %v1135
    %v1203 = vunpack.c.h.b16 %v1135
    %v1204 = vunpack.c.l.b16 %v1136
    %v1205 = vunpack.c.h.b16 %v1136
    %v1206 = vunpack.c.l.b16 %v1137
    %v1207 = vunpack.c.h.b16 %v1137
    %v1208 = vunpack.c.l.b16 %v1138
    %v1209 = vunpack.c.h.b16 %v1138
    %v1210 = vunpack.c.l.b16 %v1139
    %v1211 = vunpack.c.h.b16 %v1139
    %v1212 = vunpack.c.l.b16 %v1140
    %v1213 = vunpack.c.h.b16 %v1140
    %v1214 = vunpack.c.l.b16 %v1141
    %v1215 = vunpack.c.h.b16 %v1141
    %v1216 = vunpack.c.l.b16 %v1142
    %v1217 = vunpack.c.h.b16 %v1142
    %v1218 = vunpack.c.l.b16 %v1143
    %v1219 = vunpack.c.h.b16 %v1143
    %v1220 = vunpack.c.l.b16 %v1144
    %v1221 = vunpack.c.h.b16 %v1144
    %v1222 = vunpack.c.l.b16 %v1145
    %v1223 = vunpack.c.h.b16 %v1145
    %v1224 = vunpack.c.l.b16 %v1146
    %v1225 = vunpack.c.h.b16 %v1146
    %v1226 = vunpack.c.l.b16 %v1147
    %v1227 = vunpack.c.h.b16 %v1147
    %v1228 = vunpack.c.l.b16 %v1148
    %v1229 = vunpack.c.h.b16 %v1148
    %v1230 = vunpack.c.l.b16 %v1149
    %v1231 = vunpack.c.h.b16 %v1149
    %v1232 = vunpack.c.l.b16 %v1150
    %v1233 = vunpack.c.h.b16 %v1150
    %v1234 = vunpack.c.l.b16 %v1151
    %v1235 = vunpack.c.h.b16 %v1151
    %v1236 = vunpack.c.l.b16 %v1152
    %v1237 = vunpack.c.h.b16 %v1152
    %v1238 = vunpack.c.l.b16 %v1153
    %v1239 = vunpack.c.h.b16 %v1153
    %v1240 = vunpack.c.l.b16 %v1154
    %v1241 = vunpack.c.h.b16 %v1154
    %v1242 = vunpack.c.l.b16 %v1155
    %v1243 = vunpack.c.h.b16 %v1155
    %v1244 = vunpack.c.l.b16 %v1156
    %v1245 = vunpack.c.h.b16 %v1156
    %v1246 = vunpack.c.l.b16 %v1157
    %v1247 = vunpack.c.h.b16 %v1157
    %v1248 = vunpack.c.l.b16 %v1158
    %v1249 = vunpack.c.h.b16 %v1158
    %v1250 = vunpack.c.l.b16 %v1159
    %v1251 = vunpack.c.h.b16 %v1159
    %v1252 = vunpack.c.l.b16 %v1160
    %v1253 = vunpack.c.h.b16 %v1160
    %v1254 = vunpack.c.l.b16 %v1161
    %v1255 = vunpack.c.h.b16 %v1161
    %v1256 = vunpack.c.l.b16 %v1162
    %v1257 = vunpack.c.h.b16 %v1162
    %v1258 = vunpack.c.l.b16 %v1163
    %v1259 = vunpack.c.h.b16 %v1163
    %v1260 = vpack.c.b16 %v1200, %v1196
    %v1261 = vpack.c.b16 %v1201, %v1197
    %v1262 = vpack.c.b16 %v1202, %v1198
    %v1263 = vpack.c.b16 %v1203, %v1199
    %v1264 = vpack.c.b16 %v1208, %v1204
    %v1265 = vpack.c.b16 %v1209, %v1205
    %v1266 = vpack.c.b16 %v1210, %v1206
    %v1267 = vpack.c.b16 %v1211, %v1207
    %v1268 = vpack.c.b16 %v1216, %v1212
    %v1269 = vpack.c.b16 %v1217, %v1213
    %v1270 = vpack.c.b16 %v1218, %v1214
    %v1271 = vpack.c.b16 %v1219, %v1215
    %v1272 = vpack.c.b16 %v1224, %v1220
    %v1273 = vpack.c.b16 %v1225, %v1221
    %v1274 = vpack.c.b16 %v1226, %v1222
    %v1275 = vpack.c.b16 %v1227, %v1223
    %v1276 = vpack.c.b16 %v1232, %v1228
    %v1277 = vpack.c.b16 %v1233, %v1229
    %v1278 = vpack.c.b16 %v1234, %v1230
    %v1279 = vpack.c.b16 %v1235, %v1231
    %v1280 = vpack.c.b16 %v1240, %v1236
    %v1281 = vpack.c.b16 %v1241, %v1237
    %v1282 = vpack.c.b16 %v1242, %v1238
    %v1283 = vpack.c.b16 %v1243, %v1239
    %v1284 = vpack.c.b16 %v1248, %v1244
    %v1285 = vpack.c.b16 %v1249, %v1245
    %v1286 = vpack.c.b16 %v1250, %v1246
    %v1287 = vpack.c.b16 %v1251, %v1247
    %v1288 = vpack.c.b16 %v1256, %v1252
    %v1289 = vpack.c.b16 %v1257, %v1253
    %v1290 = vpack.c.b16 %v1258, %v1254
    %v1291 = vpack.c.b16 %v1259, %v1255
    %1324 = vmatprep.subr.bf16.mxu0 %v1289
    %1325 = vmatpush1.bf16.msra.mxu0 %v1288
    %1326 = vmatprep.subr.bf16.mxu0 %v1285
    %1327 = vmatpush1.bf16.msra.mxu0 %v1284
    %1328 = vmatprep.subr.bf16.mxu0 %v1281
    %1329 = vmatpush1.bf16.msra.mxu0 %v1280
    %1330 = vmatprep.subr.bf16.mxu0 %v1277
    %1331 = vmatpush1.bf16.msra.mxu0 %v1276
    %1332 = vmatprep.subr.bf16.mxu0 %v1273
    %1333 = vmatpush1.bf16.msra.mxu0 %v1272
    %1334 = vmatprep.subr.bf16.mxu0 %v1269
    %1335 = vmatpush1.bf16.msra.mxu0 %v1268
    %1336 = vmatprep.subr.bf16.mxu0 %v1265
    %1337 = vmatpush1.bf16.msra.mxu0 %v1264
    %1338 = vmatprep.subr.bf16.mxu0 %v1261
    %1339 = vmatpush1.bf16.msra.mxu0 %v1260
    %1340 = vmatprep.subr.bf16.mxu0 0
    %1341 = vmatpush2.bf16.msra.mxu0 0
    %1342 = vmatprep.subr.bf16.mxu0 0
    %1343 = vmatpush2.bf16.msra.mxu0 0
    %1344 = vmatprep.subr.bf16.mxu0 0
    %1345 = vmatpush2.bf16.msra.mxu0 0
    %1346 = vmatprep.subr.bf16.mxu0 0
    %1347 = vmatpush2.bf16.msra.mxu0 0
    %1348 = vmatprep.subr.bf16.mxu0 0
    %1349 = vmatpush2.bf16.msra.mxu0 0
    %1350 = vmatprep.subr.bf16.mxu0 0
    %1351 = vmatpush2.bf16.msra.mxu0 0
    %1352 = vmatprep.subr.bf16.mxu0 0
    %1353 = vmatpush2.bf16.msra.mxu0 0
    %1354 = vmatprep.subr.bf16.mxu0 0
    %1355 = vmatpush2.bf16.msra.mxu0 0
    %1356 = vmatprep.mubr.bf16.mxu0 0
    %1357 = vmatmul.mubr.bf16.gmra.mxu0 %v1130
    %v1358 = vpop.f32.mrf.mxu0
    %v1359 = vadd.f32 0.0, %v1358
    %v1360 = vpop.f32.mrf.mxu0
    %v1361 = vadd.f32 0.0, %v1360
    %v1362 = vpop.f32.mrf.mxu0
    %v1363 = vpop.f32.mrf.mxu0
    %1364 = vdwg.mxu0
    %1365 = vmatprep.subr.bf16.mxu0 %v1291
    %1366 = vmatpush1.bf16.msra.mxu0 %v1290
    %1367 = vmatprep.subr.bf16.mxu0 %v1287
    %1368 = vmatpush1.bf16.msra.mxu0 %v1286
    %1369 = vmatprep.subr.bf16.mxu0 %v1283
    %1370 = vmatpush1.bf16.msra.mxu0 %v1282
    %1371 = vmatprep.subr.bf16.mxu0 %v1279
    %1372 = vmatpush1.bf16.msra.mxu0 %v1278
    %1373 = vmatprep.subr.bf16.mxu0 %v1275
    %1374 = vmatpush1.bf16.msra.mxu0 %v1274
    %1375 = vmatprep.subr.bf16.mxu0 %v1271
    %1376 = vmatpush1.bf16.msra.mxu0 %v1270
    %1377 = vmatprep.subr.bf16.mxu0 %v1267
    %1378 = vmatpush1.bf16.msra.mxu0 %v1266
    %1379 = vmatprep.subr.bf16.mxu0 %v1263
    %1380 = vmatpush1.bf16.msra.mxu0 %v1262
    %1381 = vmatprep.subr.bf16.mxu0 0
    %1382 = vmatpush2.bf16.msra.mxu0 0
    %1383 = vmatprep.subr.bf16.mxu0 0
    %1384 = vmatpush2.bf16.msra.mxu0 0
    %1385 = vmatprep.subr.bf16.mxu0 0
    %1386 = vmatpush2.bf16.msra.mxu0 0
    %1387 = vmatprep.subr.bf16.mxu0 0
    %1388 = vmatpush2.bf16.msra.mxu0 0
    %1389 = vmatprep.subr.bf16.mxu0 0
    %1390 = vmatpush2.bf16.msra.mxu0 0
    %1391 = vmatprep.subr.bf16.mxu0 0
    %1392 = vmatpush2.bf16.msra.mxu0 0
    %1393 = vmatprep.subr.bf16.mxu0 0
    %1394 = vmatpush2.bf16.msra.mxu0 0
    %1395 = vmatprep.subr.bf16.mxu0 0
    %1396 = vmatpush2.bf16.msra.mxu0 0
    %1397 = vmatprep.mubr.bf16.mxu0 0
    %1398 = vmatmul.mubr.bf16.gmra.mxu0 %v1130
    %v1399 = vpop.f32.mrf.mxu0
    %v1400 = vadd.f32 0.0, %v1399
    %v1401 = vpop.f32.mrf.mxu0
    %v1402 = vadd.f32 0.0, %v1401
    %v1403 = vpop.f32.mrf.mxu0
    %v1404 = vadd.f32 0.0, %v1403
    %v1405 = vpop.f32.mrf.mxu0
    %v1406 = vadd.f32 0.0, %v1405
    %1407 = vdwg.mxu0
    %v1409 = vrot.slane %v1361, 2
    %v1411 = vadd.f32 %v1359, %v1409
    %v1414 = vrot.slane %v1400, 4
    %v1415 = vrot.slane %v1404, 4
    %v1416 = vsel %vm381, %v1414, %v1415
    %v1418 = vadd.f32 %v1411, %v1416
    %v1421 = vrot.slane %v1402, 6
    %v1422 = vrot.slane %v1406, 6
    %v1423 = vsel %vm404, %v1421, %v1422
    %v1425 = vadd.f32 %v1418, %v1423
    %s1426 = scalar_lea.vmem [#allocation2], 24
    %v1427 = vld [vmem:[%s1426] sm:$0xf]
    %v1428 = vpack.c.bf16 %v1425, %v1425
    %s1429 = scalar_lea.vmem %s3, 96
    %v1430 = vld [vmem:[%s1429] sm:$0xff]
    %vm1431 = vcmask 48128
    %v1433 = vsel %vm1431, %v1427, 0
    %vm1435 = vcmask 1042432
    %v1437 = vsel %vm1435, %v1428, 0
    %1439 = vmatprep.subr.bf16.mxu0 0
    %1440 = vmatpush1.bf16.msra.mxu0 0
    %1441 = vmatprep.subr.bf16.mxu0 0
    %1442 = vmatpush1.bf16.msra.mxu0 0
    %1443 = vmatprep.subr.bf16.mxu0 0
    %1444 = vmatpush1.bf16.msra.mxu0 0
    %1445 = vmatprep.subr.bf16.mxu0 0
    %1446 = vmatpush1.bf16.msra.mxu0 0
    %1447 = vmatprep.subr.bf16.mxu0 0
    %1448 = vmatpush1.bf16.msra.mxu0 0
    %1449 = vmatprep.subr.bf16.mxu0 0
    %1450 = vmatpush1.bf16.msra.mxu0 0
    %1451 = vmatprep.subr.bf16.mxu0 0
    %1452 = vmatpush1.bf16.msra.mxu0 0
    %1453 = vmatprep.subr.bf16.mxu0 0
    %1454 = vmatpush1.bf16.msra.mxu0 %v1437
    %1455 = vmatprep.subr.bf16.mxu0 0
    %1456 = vmatpush2.bf16.msra.mxu0 0
    %1457 = vmatprep.subr.bf16.mxu0 0
    %1458 = vmatpush2.bf16.msra.mxu0 0
    %1459 = vmatprep.subr.bf16.mxu0 0
    %1460 = vmatpush2.bf16.msra.mxu0 0
    %1461 = vmatprep.subr.bf16.mxu0 0
    %1462 = vmatpush2.bf16.msra.mxu0 0
    %1463 = vmatprep.subr.bf16.mxu0 0
    %1464 = vmatpush2.bf16.msra.mxu0 0
    %1465 = vmatprep.subr.bf16.mxu0 0
    %1466 = vmatpush2.bf16.msra.mxu0 0
    %1467 = vmatprep.subr.bf16.mxu0 0
    %1468 = vmatpush2.bf16.msra.mxu0 0
    %1469 = vmatprep.subr.bf16.mxu0 0
    %1470 = vmatpush2.bf16.msra.mxu0 0
    %1471 = vmatprep.mubr.bf16.mxu0 0
    %1472 = vmatmul.mubr.bf16.gmra.mxu0 %v1433
    %v1473 = vpop.f32.mrf.mxu0
    %v1474 = vadd.f32 %v1430, %v1473
    %v1475 = vpop.f32.mrf.mxu0
    %v1476 = vpop.f32.mrf.mxu0
    %v1477 = vpop.f32.mrf.mxu0
    %1478 = vdwg.mxu0
    %s1479 = scalar_lea.vmem %s4, 256
    %v1480 = vld [vmem:[%s1479] sm:$0xff]
    %v1481 = vld [vmem:[%s1479 + $0x8] sm:$0xff]
    %v1482 = vld [vmem:[%s1479 + $0x10] sm:$0xff]
    %v1483 = vld [vmem:[%s1479 + $0x18] sm:$0xff]
    %v1484 = vld [vmem:[%s1479 + $0x20] sm:$0xff]
    %v1485 = vld [vmem:[%s1479 + $0x28] sm:$0xff]
    %v1486 = vld [vmem:[%s1479 + $0x30] sm:$0xff]
    %v1487 = vld [vmem:[%s1479 + $0x38] sm:$0xff]
    %v1488 = vld [vmem:[%s1479 + $0x40] sm:$0xff]
    %v1489 = vld [vmem:[%s1479 + $0x48] sm:$0xff]
    %v1490 = vld [vmem:[%s1479 + $0x50] sm:$0xff]
    %v1491 = vld [vmem:[%s1479 + $0x58] sm:$0xff]
    %v1492 = vld [vmem:[%s1479 + $0x60] sm:$0xff]
    %v1493 = vld [vmem:[%s1479 + $0x68] sm:$0xff]
    %v1494 = vld [vmem:[%s1479 + $0x70] sm:$0xff]
    %v1495 = vld [vmem:[%s1479 + $0x78] sm:$0xff]
    %s1496 = scalar_lea.vmem %s4, 384
    %v1497 = vld [vmem:[%s1496] sm:$0xff]
    %v1498 = vld [vmem:[%s1496 + $0x8] sm:$0xff]
    %v1499 = vld [vmem:[%s1496 + $0x10] sm:$0xff]
    %v1500 = vld [vmem:[%s1496 + $0x18] sm:$0xff]
    %v1501 = vld [vmem:[%s1496 + $0x20] sm:$0xff]
    %v1502 = vld [vmem:[%s1496 + $0x28] sm:$0xff]
    %v1503 = vld [vmem:[%s1496 + $0x30] sm:$0xff]
    %v1504 = vld [vmem:[%s1496 + $0x38] sm:$0xff]
    %v1505 = vld [vmem:[%s1496 + $0x40] sm:$0xff]
    %v1506 = vld [vmem:[%s1496 + $0x48] sm:$0xff]
    %v1507 = vld [vmem:[%s1496 + $0x50] sm:$0xff]
    %v1508 = vld [vmem:[%s1496 + $0x58] sm:$0xff]
    %v1509 = vld [vmem:[%s1496 + $0x60] sm:$0xff]
    %v1510 = vld [vmem:[%s1496 + $0x68] sm:$0xff]
    %v1511 = vld [vmem:[%s1496 + $0x70] sm:$0xff]
    %v1512 = vld [vmem:[%s1496 + $0x78] sm:$0xff]
    %v1513 = vrot.slane %v1474, 4
    %v1514 = vadd.f32 %v1474, %v1513
    %v1515 = vrot.slane %v1514, 2
    %v1516 = vadd.f32 %v1514, %v1515
    %v1517 = vrot.slane %v1516, 1
    %v1518 = vadd.f32 %v1516, %v1517
    %v1519 = vmul.f32 %v1474, %v1474
    %v1520 = vrot.slane %v1519, 4
    %v1521 = vadd.f32 %v1519, %v1520
    %v1522 = vrot.slane %v1521, 2
    %v1523 = vadd.f32 %v1521, %v1522
    %v1524 = vrot.slane %v1523, 1
    %v1525 = vadd.f32 %v1523, %v1524
    %v1526 = vsel %vm945, %v1518, %v1525
    %1527 = vmatprep.subr.mxu0 0.0
    %1528 = vmatpush1.msra.mxu0 %v1495
    %1529 = vmatprep.subr.mxu0 0.0
    %1530 = vmatpush1.msra.mxu0 %v1494
    %1531 = vmatprep.subr.mxu0 0.0
    %1532 = vmatpush1.msra.mxu0 %v1493
    %1533 = vmatprep.subr.mxu0 0.0
    %1534 = vmatpush1.msra.mxu0 %v1492
    %1535 = vmatprep.subr.mxu0 0.0
    %1536 = vmatpush1.msra.mxu0 %v1491
    %1537 = vmatprep.subr.mxu0 0.0
    %1538 = vmatpush1.msra.mxu0 %v1490
    %1539 = vmatprep.subr.mxu0 0.0
    %1540 = vmatpush1.msra.mxu0 %v1489
    %1541 = vmatprep.subr.mxu0 0.0
    %1542 = vmatpush1.msra.mxu0 %v1488
    %1543 = vmatprep.subr.mxu0 0.0
    %1544 = vmatpush1.msra.mxu0 %v1487
    %1545 = vmatprep.subr.mxu0 0.0
    %1546 = vmatpush1.msra.mxu0 %v1486
    %1547 = vmatprep.subr.mxu0 0.0
    %1548 = vmatpush1.msra.mxu0 %v1485
    %1549 = vmatprep.subr.mxu0 0.0
    %1550 = vmatpush1.msra.mxu0 %v1484
    %1551 = vmatprep.subr.mxu0 0.0
    %1552 = vmatpush1.msra.mxu0 %v1483
    %1553 = vmatprep.subr.mxu0 0.0
    %1554 = vmatpush1.msra.mxu0 %v1482
    %1555 = vmatprep.subr.mxu0 0.0
    %1556 = vmatpush1.msra.mxu0 %v1481
    %1557 = vmatprep.subr.mxu0 0.0
    %1558 = vmatpush1.msra.mxu0 %v1480
    %1559 = vmatprep.subr.mxu0 0.0
    %1560 = vmatpush2.msra.mxu0 0.0
    %1561 = vmatprep.subr.mxu0 0.0
    %1562 = vmatpush2.msra.mxu0 0.0
    %1563 = vmatprep.subr.mxu0 0.0
    %1564 = vmatpush2.msra.mxu0 0.0
    %1565 = vmatprep.subr.mxu0 0.0
    %1566 = vmatpush2.msra.mxu0 0.0
    %1567 = vmatprep.subr.mxu0 0.0
    %1568 = vmatpush2.msra.mxu0 0.0
    %1569 = vmatprep.subr.mxu0 0.0
    %1570 = vmatpush2.msra.mxu0 0.0
    %1571 = vmatprep.subr.mxu0 0.0
    %1572 = vmatpush2.msra.mxu0 0.0
    %1573 = vmatprep.subr.mxu0 0.0
    %1574 = vmatpush2.msra.mxu0 0.0
    %1575 = vmatprep.subr.mxu0 0.0
    %1576 = vmatpush2.msra.mxu0 0.0
    %1577 = vmatprep.subr.mxu0 0.0
    %1578 = vmatpush2.msra.mxu0 0.0
    %1579 = vmatprep.subr.mxu0 0.0
    %1580 = vmatpush2.msra.mxu0 0.0
    %1581 = vmatprep.subr.mxu0 0.0
    %1582 = vmatpush2.msra.mxu0 0.0
    %1583 = vmatprep.subr.mxu0 0.0
    %1584 = vmatpush2.msra.mxu0 0.0
    %1585 = vmatprep.subr.mxu0 0.0
    %1586 = vmatpush2.msra.mxu0 0.0
    %1587 = vmatprep.subr.mxu0 0.0
    %1588 = vmatpush2.msra.mxu0 0.0
    %1589 = vmatprep.subr.mxu0 0.0
    %1590 = vmatpush2.msra.mxu0 0.0
    %1591 = vmatprep.mubr.f32.mxu0 0.0
    %1592 = vmatmul.mubr.f32.gmra.mxu0 %v1526
    %v1593 = vpop.f32.mrf.mxu0
    %v1594 = vadd.f32 0.0, %v1593
    %v1595 = vpop.f32.mrf.mxu0
    %1596 = vdwg.mxu0
    %v1597 = vmul.f32 %v1594, 0.125
    %v1598 = vmul.f32 %v1597, %v1597
    %v1600 = vrot.slane %v1598, 7
    %v1602 = vsub.f32 %v1597, %v1600
    %v1603 = vadd.f32 %v1602, 1e-05
    %v1604 = vrsqrt.pop %v1603
    %s1605 = scalar_lea.vmem %s3, 264
    %v1606 = vld [vmem:[%s1605] sm:$0xff]
    %v1608 = vrot.slane %v1604, 1
    %v1610 = vmul.f32 %v1606, %v1608
    %v1611 = vmul.f32 %v1597, %v1610
    %v1613 = vrot.slane %v1611, 7
    %v1615 = vsub.f32 %v1606, %v1613
    %v1616 = vsel %vm945, %v1610, %v1615
    %1617 = vmatprep.subr.mxu0 0.0
    %1618 = vmatpush1.msra.mxu0 %v1512
    %1619 = vmatprep.subr.mxu0 0.0
    %1620 = vmatpush1.msra.mxu0 %v1511
    %1621 = vmatprep.subr.mxu0 0.0
    %1622 = vmatpush1.msra.mxu0 %v1510
    %1623 = vmatprep.subr.mxu0 0.0
    %1624 = vmatpush1.msra.mxu0 %v1509
    %1625 = vmatprep.subr.mxu0 0.0
    %1626 = vmatpush1.msra.mxu0 %v1508
    %1627 = vmatprep.subr.mxu0 0.0
    %1628 = vmatpush1.msra.mxu0 %v1507
    %1629 = vmatprep.subr.mxu0 0.0
    %1630 = vmatpush1.msra.mxu0 %v1506
    %1631 = vmatprep.subr.mxu0 0.0
    %1632 = vmatpush1.msra.mxu0 %v1505
    %1633 = vmatprep.subr.mxu0 0.0
    %1634 = vmatpush1.msra.mxu0 %v1504
    %1635 = vmatprep.subr.mxu0 0.0
    %1636 = vmatpush1.msra.mxu0 %v1503
    %1637 = vmatprep.subr.mxu0 0.0
    %1638 = vmatpush1.msra.mxu0 %v1502
    %1639 = vmatprep.subr.mxu0 0.0
    %1640 = vmatpush1.msra.mxu0 %v1501
    %1641 = vmatprep.subr.mxu0 0.0
    %1642 = vmatpush1.msra.mxu0 %v1500
    %1643 = vmatprep.subr.mxu0 0.0
    %1644 = vmatpush1.msra.mxu0 %v1499
    %1645 = vmatprep.subr.mxu0 0.0
    %1646 = vmatpush1.msra.mxu0 %v1498
    %1647 = vmatprep.subr.mxu0 0.0
    %1648 = vmatpush1.msra.mxu0 %v1497
    %1649 = vmatprep.subr.mxu0 0.0
    %1650 = vmatpush2.msra.mxu0 0.0
    %1651 = vmatprep.subr.mxu0 0.0
    %1652 = vmatpush2.msra.mxu0 0.0
    %1653 = vmatprep.subr.mxu0 0.0
    %1654 = vmatpush2.msra.mxu0 0.0
    %1655 = vmatprep.subr.mxu0 0.0
    %1656 = vmatpush2.msra.mxu0 0.0
    %1657 = vmatprep.subr.mxu0 0.0
    %1658 = vmatpush2.msra.mxu0 0.0
    %1659 = vmatprep.subr.mxu0 0.0
    %1660 = vmatpush2.msra.mxu0 0.0
    %1661 = vmatprep.subr.mxu0 0.0
    %1662 = vmatpush2.msra.mxu0 0.0
    %1663 = vmatprep.subr.mxu0 0.0
    %1664 = vmatpush2.msra.mxu0 0.0
    %1665 = vmatprep.subr.mxu0 0.0
    %1666 = vmatpush2.msra.mxu0 0.0
    %1667 = vmatprep.subr.mxu0 0.0
    %1668 = vmatpush2.msra.mxu0 0.0
    %1669 = vmatprep.subr.mxu0 0.0
    %1670 = vmatpush2.msra.mxu0 0.0
    %1671 = vmatprep.subr.mxu0 0.0
    %1672 = vmatpush2.msra.mxu0 0.0
    %1673 = vmatprep.subr.mxu0 0.0
    %1674 = vmatpush2.msra.mxu0 0.0
    %1675 = vmatprep.subr.mxu0 0.0
    %1676 = vmatpush2.msra.mxu0 0.0
    %1677 = vmatprep.subr.mxu0 0.0
    %1678 = vmatpush2.msra.mxu0 0.0
    %1679 = vmatprep.subr.mxu0 0.0
    %1680 = vmatpush2.msra.mxu0 0.0
    %1681 = vmatprep.mubr.f32.mxu0 0.0
    %1682 = vmatmul.mubr.f32.gmra.mxu0 %v1616
    %v1683 = vpop.f32.mrf.mxu0
    %v1684 = vadd.f32 0.0, %v1683
    %v1685 = vpop.f32.mrf.mxu0
    %1686 = vdwg.mxu0
    %v1687 = vlaneseq
    %v1688 = vshrl.u32 %v1687, 7
    %v1689 = vsub.s32 0, %v1688
    %v1690 = vrot.slane %v1684, %v1689
    %v1691 = vmul.f32 %v1474, %v1690
    %v1692 = vlaneseq
    %v1693 = vshrl.u32 %v1692, 7
    %v1694 = vsub.s32 1, %v1693
    %v1695 = vrot.slane %v1684, %v1694
    %v1696 = vadd.f32 %v1691, %v1695
    %vm1697 = vcmp.ge.f32.partialorder %v1696, 0.0
    %v1698 = vmul.f32 %v1696, 0.2
    %v1699 = vsel %vm1697, %v1696, %v1698
    %s1700 = scalar_lea.vmem %s3, 120
    %v1701 = vld [vmem:[%s1700] sm:$0xff]
    %v1702 = vmul.f32 %v1699, %v1701
    %v1703 = vpack.c.bf16 %v1702, %v1702
    %s1704 = scalar_lea.vmem %s1, 768
    %v1705 = vld [vmem:[%s1704] sm:$0xff]
    %v1706 = vld [vmem:[%s1704 + $0x8] sm:$0xff]
    %v1707 = vld [vmem:[%s1704 + $0x10] sm:$0xff]
    %v1708 = vld [vmem:[%s1704 + $0x18] sm:$0xff]
    %v1709 = vld [vmem:[%s1704 + $0x20] sm:$0xff]
    %v1710 = vld [vmem:[%s1704 + $0x28] sm:$0xff]
    %v1711 = vld [vmem:[%s1704 + $0x30] sm:$0xff]
    %v1712 = vld [vmem:[%s1704 + $0x38] sm:$0xff]
    %v1713 = vld [vmem:[%s1704 + $0x40] sm:$0xff]
    %v1714 = vld [vmem:[%s1704 + $0x48] sm:$0xff]
    %v1715 = vld [vmem:[%s1704 + $0x50] sm:$0xff]
    %v1716 = vld [vmem:[%s1704 + $0x58] sm:$0xff]
    %v1717 = vld [vmem:[%s1704 + $0x60] sm:$0xff]
    %v1718 = vld [vmem:[%s1704 + $0x68] sm:$0xff]
    %v1719 = vld [vmem:[%s1704 + $0x70] sm:$0xff]
    %v1720 = vld [vmem:[%s1704 + $0x78] sm:$0xff]
    %v1721 = vld [vmem:[%s1704 + $0x80] sm:$0xff]
    %v1722 = vld [vmem:[%s1704 + $0x88] sm:$0xff]
    %v1723 = vld [vmem:[%s1704 + $0x90] sm:$0xff]
    %v1724 = vld [vmem:[%s1704 + $0x98] sm:$0xff]
    %v1725 = vld [vmem:[%s1704 + $0xa0] sm:$0xff]
    %v1726 = vld [vmem:[%s1704 + $0xa8] sm:$0xff]
    %v1727 = vld [vmem:[%s1704 + $0xb0] sm:$0xff]
    %v1728 = vld [vmem:[%s1704 + $0xb8] sm:$0xff]
    %v1729 = vld [vmem:[%s1704 + $0xc0] sm:$0xff]
    %v1730 = vld [vmem:[%s1704 + $0xc8] sm:$0xff]
    %v1731 = vld [vmem:[%s1704 + $0xd0] sm:$0xff]
    %v1732 = vld [vmem:[%s1704 + $0xd8] sm:$0xff]
    %v1733 = vld [vmem:[%s1704 + $0xe0] sm:$0xff]
    %v1734 = vld [vmem:[%s1704 + $0xe8] sm:$0xff]
    %v1735 = vld [vmem:[%s1704 + $0xf0] sm:$0xff]
    %v1736 = vld [vmem:[%s1704 + $0xf8] sm:$0xff]
    %v1769 = vunpack.c.l.b16 %v1705
    %v1770 = vunpack.c.h.b16 %v1705
    %v1771 = vunpack.c.l.b16 %v1706
    %v1772 = vunpack.c.h.b16 %v1706
    %v1773 = vunpack.c.l.b16 %v1707
    %v1774 = vunpack.c.h.b16 %v1707
    %v1775 = vunpack.c.l.b16 %v1708
    %v1776 = vunpack.c.h.b16 %v1708
    %v1777 = vunpack.c.l.b16 %v1709
    %v1778 = vunpack.c.h.b16 %v1709
    %v1779 = vunpack.c.l.b16 %v1710
    %v1780 = vunpack.c.h.b16 %v1710
    %v1781 = vunpack.c.l.b16 %v1711
    %v1782 = vunpack.c.h.b16 %v1711
    %v1783 = vunpack.c.l.b16 %v1712
    %v1784 = vunpack.c.h.b16 %v1712
    %v1785 = vunpack.c.l.b16 %v1713
    %v1786 = vunpack.c.h.b16 %v1713
    %v1787 = vunpack.c.l.b16 %v1714
    %v1788 = vunpack.c.h.b16 %v1714
    %v1789 = vunpack.c.l.b16 %v1715
    %v1790 = vunpack.c.h.b16 %v1715
    %v1791 = vunpack.c.l.b16 %v1716
    %v1792 = vunpack.c.h.b16 %v1716
    %v1793 = vunpack.c.l.b16 %v1717
    %v1794 = vunpack.c.h.b16 %v1717
    %v1795 = vunpack.c.l.b16 %v1718
    %v1796 = vunpack.c.h.b16 %v1718
    %v1797 = vunpack.c.l.b16 %v1719
    %v1798 = vunpack.c.h.b16 %v1719
    %v1799 = vunpack.c.l.b16 %v1720
    %v1800 = vunpack.c.h.b16 %v1720
    %v1801 = vunpack.c.l.b16 %v1721
    %v1802 = vunpack.c.h.b16 %v1721
    %v1803 = vunpack.c.l.b16 %v1722
    %v1804 = vunpack.c.h.b16 %v1722
    %v1805 = vunpack.c.l.b16 %v1723
    %v1806 = vunpack.c.h.b16 %v1723
    %v1807 = vunpack.c.l.b16 %v1724
    %v1808 = vunpack.c.h.b16 %v1724
    %v1809 = vunpack.c.l.b16 %v1725
    %v1810 = vunpack.c.h.b16 %v1725
    %v1811 = vunpack.c.l.b16 %v1726
    %v1812 = vunpack.c.h.b16 %v1726
    %v1813 = vunpack.c.l.b16 %v1727
    %v1814 = vunpack.c.h.b16 %v1727
    %v1815 = vunpack.c.l.b16 %v1728
    %v1816 = vunpack.c.h.b16 %v1728
    %v1817 = vunpack.c.l.b16 %v1729
    %v1818 = vunpack.c.h.b16 %v1729
    %v1819 = vunpack.c.l.b16 %v1730
    %v1820 = vunpack.c.h.b16 %v1730
    %v1821 = vunpack.c.l.b16 %v1731
    %v1822 = vunpack.c.h.b16 %v1731
    %v1823 = vunpack.c.l.b16 %v1732
    %v1824 = vunpack.c.h.b16 %v1732
    %v1825 = vunpack.c.l.b16 %v1733
    %v1826 = vunpack.c.h.b16 %v1733
    %v1827 = vunpack.c.l.b16 %v1734
    %v1828 = vunpack.c.h.b16 %v1734
    %v1829 = vunpack.c.l.b16 %v1735
    %v1830 = vunpack.c.h.b16 %v1735
    %v1831 = vunpack.c.l.b16 %v1736
    %v1832 = vunpack.c.h.b16 %v1736
    %v1833 = vpack.c.b16 %v1773, %v1769
    %v1834 = vpack.c.b16 %v1774, %v1770
    %v1835 = vpack.c.b16 %v1775, %v1771
    %v1836 = vpack.c.b16 %v1776, %v1772
    %v1837 = vpack.c.b16 %v1781, %v1777
    %v1838 = vpack.c.b16 %v1782, %v1778
    %v1839 = vpack.c.b16 %v1783, %v1779
    %v1840 = vpack.c.b16 %v1784, %v1780
    %v1841 = vpack.c.b16 %v1789, %v1785
    %v1842 = vpack.c.b16 %v1790, %v1786
    %v1843 = vpack.c.b16 %v1791, %v1787
    %v1844 = vpack.c.b16 %v1792, %v1788
    %v1845 = vpack.c.b16 %v1797, %v1793
    %v1846 = vpack.c.b16 %v1798, %v1794
    %v1847 = vpack.c.b16 %v1799, %v1795
    %v1848 = vpack.c.b16 %v1800, %v1796
    %v1849 = vpack.c.b16 %v1805, %v1801
    %v1850 = vpack.c.b16 %v1806, %v1802
    %v1851 = vpack.c.b16 %v1807, %v1803
    %v1852 = vpack.c.b16 %v1808, %v1804
    %v1853 = vpack.c.b16 %v1813, %v1809
    %v1854 = vpack.c.b16 %v1814, %v1810
    %v1855 = vpack.c.b16 %v1815, %v1811
    %v1856 = vpack.c.b16 %v1816, %v1812
    %v1857 = vpack.c.b16 %v1821, %v1817
    %v1858 = vpack.c.b16 %v1822, %v1818
    %v1859 = vpack.c.b16 %v1823, %v1819
    %v1860 = vpack.c.b16 %v1824, %v1820
    %v1861 = vpack.c.b16 %v1829, %v1825
    %v1862 = vpack.c.b16 %v1830, %v1826
    %v1863 = vpack.c.b16 %v1831, %v1827
    %v1864 = vpack.c.b16 %v1832, %v1828
    %1897 = vmatprep.subr.bf16.mxu0 %v1862
    %1898 = vmatpush1.bf16.msra.mxu0 %v1861
    %1899 = vmatprep.subr.bf16.mxu0 %v1858
    %1900 = vmatpush1.bf16.msra.mxu0 %v1857
    %1901 = vmatprep.subr.bf16.mxu0 %v1854
    %1902 = vmatpush1.bf16.msra.mxu0 %v1853
    %1903 = vmatprep.subr.bf16.mxu0 %v1850
    %1904 = vmatpush1.bf16.msra.mxu0 %v1849
    %1905 = vmatprep.subr.bf16.mxu0 %v1846
    %1906 = vmatpush1.bf16.msra.mxu0 %v1845
    %1907 = vmatprep.subr.bf16.mxu0 %v1842
    %1908 = vmatpush1.bf16.msra.mxu0 %v1841
    %1909 = vmatprep.subr.bf16.mxu0 %v1838
    %1910 = vmatpush1.bf16.msra.mxu0 %v1837
    %1911 = vmatprep.subr.bf16.mxu0 %v1834
    %1912 = vmatpush1.bf16.msra.mxu0 %v1833
    %1913 = vmatprep.subr.bf16.mxu0 0
    %1914 = vmatpush2.bf16.msra.mxu0 0
    %1915 = vmatprep.subr.bf16.mxu0 0
    %1916 = vmatpush2.bf16.msra.mxu0 0
    %1917 = vmatprep.subr.bf16.mxu0 0
    %1918 = vmatpush2.bf16.msra.mxu0 0
    %1919 = vmatprep.subr.bf16.mxu0 0
    %1920 = vmatpush2.bf16.msra.mxu0 0
    %1921 = vmatprep.subr.bf16.mxu0 0
    %1922 = vmatpush2.bf16.msra.mxu0 0
    %1923 = vmatprep.subr.bf16.mxu0 0
    %1924 = vmatpush2.bf16.msra.mxu0 0
    %1925 = vmatprep.subr.bf16.mxu0 0
    %1926 = vmatpush2.bf16.msra.mxu0 0
    %1927 = vmatprep.subr.bf16.mxu0 0
    %1928 = vmatpush2.bf16.msra.mxu0 0
    %1929 = vmatprep.mubr.bf16.mxu0 0
    %1930 = vmatmul.mubr.bf16.gmra.mxu0 %v1703
    %v1931 = vpop.f32.mrf.mxu0
    %v1932 = vadd.f32 0.0, %v1931
    %v1933 = vpop.f32.mrf.mxu0
    %v1934 = vadd.f32 0.0, %v1933
    %v1935 = vpop.f32.mrf.mxu0
    %v1936 = vpop.f32.mrf.mxu0
    %1937 = vdwg.mxu0
    %1938 = vmatprep.subr.bf16.mxu0 %v1864
    %1939 = vmatpush1.bf16.msra.mxu0 %v1863
    %1940 = vmatprep.subr.bf16.mxu0 %v1860
    %1941 = vmatpush1.bf16.msra.mxu0 %v1859
    %1942 = vmatprep.subr.bf16.mxu0 %v1856
    %1943 = vmatpush1.bf16.msra.mxu0 %v1855
    %1944 = vmatprep.subr.bf16.mxu0 %v1852
    %1945 = vmatpush1.bf16.msra.mxu0 %v1851
    %1946 = vmatprep.subr.bf16.mxu0 %v1848
    %1947 = vmatpush1.bf16.msra.mxu0 %v1847
    %1948 = vmatprep.subr.bf16.mxu0 %v1844
    %1949 = vmatpush1.bf16.msra.mxu0 %v1843
    %1950 = vmatprep.subr.bf16.mxu0 %v1840
    %1951 = vmatpush1.bf16.msra.mxu0 %v1839
    %1952 = vmatprep.subr.bf16.mxu0 %v1836
    %1953 = vmatpush1.bf16.msra.mxu0 %v1835
    %1954 = vmatprep.subr.bf16.mxu0 0
    %1955 = vmatpush2.bf16.msra.mxu0 0
    %1956 = vmatprep.subr.bf16.mxu0 0
    %1957 = vmatpush2.bf16.msra.mxu0 0
    %1958 = vmatprep.subr.bf16.mxu0 0
    %1959 = vmatpush2.bf16.msra.mxu0 0
    %1960 = vmatprep.subr.bf16.mxu0 0
    %1961 = vmatpush2.bf16.msra.mxu0 0
    %1962 = vmatprep.subr.bf16.mxu0 0
    %1963 = vmatpush2.bf16.msra.mxu0 0
    %1964 = vmatprep.subr.bf16.mxu0 0
    %1965 = vmatpush2.bf16.msra.mxu0 0
    %1966 = vmatprep.subr.bf16.mxu0 0
    %1967 = vmatpush2.bf16.msra.mxu0 0
    %1968 = vmatprep.subr.bf16.mxu0 0
    %1969 = vmatpush2.bf16.msra.mxu0 0
    %1970 = vmatprep.mubr.bf16.mxu0 0
    %1971 = vmatmul.mubr.bf16.gmra.mxu0 %v1703
    %v1972 = vpop.f32.mrf.mxu0
    %v1973 = vadd.f32 0.0, %v1972
    %v1974 = vpop.f32.mrf.mxu0
    %v1975 = vadd.f32 0.0, %v1974
    %v1976 = vpop.f32.mrf.mxu0
    %v1977 = vpop.f32.mrf.mxu0
    %1978 = vdwg.mxu0
    %v1980 = vrot.slane %v1934, 2
    %v1982 = vadd.f32 %v1932, %v1980
    %v1984 = vrot.slane %v1973, 4
    %v1986 = vadd.f32 %v1982, %v1984
    %v1988 = vrot.slane %v1975, 6
    %v1990 = vadd.f32 %v1986, %v1988
    %s1991 = scalar_lea.vmem %s3, 144
    %v1992 = vld [vmem:[%s1991] sm:$0xff]
    %v1993 = vadd.f32 %v1990, %v1992
    %s1994 = scalar_lea.vmem %s4, 512
    %v1995 = vld [vmem:[%s1994] sm:$0xff]
    %v1996 = vld [vmem:[%s1994 + $0x8] sm:$0xff]
    %v1997 = vld [vmem:[%s1994 + $0x10] sm:$0xff]
    %v1998 = vld [vmem:[%s1994 + $0x18] sm:$0xff]
    %v1999 = vld [vmem:[%s1994 + $0x20] sm:$0xff]
    %v2000 = vld [vmem:[%s1994 + $0x28] sm:$0xff]
    %v2001 = vld [vmem:[%s1994 + $0x30] sm:$0xff]
    %v2002 = vld [vmem:[%s1994 + $0x38] sm:$0xff]
    %v2003 = vld [vmem:[%s1994 + $0x40] sm:$0xff]
    %v2004 = vld [vmem:[%s1994 + $0x48] sm:$0xff]
    %v2005 = vld [vmem:[%s1994 + $0x50] sm:$0xff]
    %v2006 = vld [vmem:[%s1994 + $0x58] sm:$0xff]
    %v2007 = vld [vmem:[%s1994 + $0x60] sm:$0xff]
    %v2008 = vld [vmem:[%s1994 + $0x68] sm:$0xff]
    %v2009 = vld [vmem:[%s1994 + $0x70] sm:$0xff]
    %v2010 = vld [vmem:[%s1994 + $0x78] sm:$0xff]
    %s2011 = scalar_lea.vmem %s4, 640
    %v2012 = vld [vmem:[%s2011] sm:$0xff]
    %v2013 = vld [vmem:[%s2011 + $0x8] sm:$0xff]
    %v2014 = vld [vmem:[%s2011 + $0x10] sm:$0xff]
    %v2015 = vld [vmem:[%s2011 + $0x18] sm:$0xff]
    %v2016 = vld [vmem:[%s2011 + $0x20] sm:$0xff]
    %v2017 = vld [vmem:[%s2011 + $0x28] sm:$0xff]
    %v2018 = vld [vmem:[%s2011 + $0x30] sm:$0xff]
    %v2019 = vld [vmem:[%s2011 + $0x38] sm:$0xff]
    %v2020 = vld [vmem:[%s2011 + $0x40] sm:$0xff]
    %v2021 = vld [vmem:[%s2011 + $0x48] sm:$0xff]
    %v2022 = vld [vmem:[%s2011 + $0x50] sm:$0xff]
    %v2023 = vld [vmem:[%s2011 + $0x58] sm:$0xff]
    %v2024 = vld [vmem:[%s2011 + $0x60] sm:$0xff]
    %v2025 = vld [vmem:[%s2011 + $0x68] sm:$0xff]
    %v2026 = vld [vmem:[%s2011 + $0x70] sm:$0xff]
    %v2027 = vld [vmem:[%s2011 + $0x78] sm:$0xff]
    %v2028 = vsel %vm404, %v1993, 0.0
    %v2029 = vrot.slane %v2028, 4
    %v2030 = vadd.f32 %v2028, %v2029
    %v2031 = vrot.slane %v2030, 2
    %v2032 = vadd.f32 %v2030, %v2031
    %v2033 = vrot.slane %v2032, 1
    %v2034 = vadd.f32 %v2032, %v2033
    %v2035 = vmul.f32 %v1993, %v1993
    %v2036 = vsel %vm404, %v2035, 0.0
    %v2037 = vrot.slane %v2036, 4
    %v2038 = vadd.f32 %v2036, %v2037
    %v2039 = vrot.slane %v2038, 2
    %v2040 = vadd.f32 %v2038, %v2039
    %v2041 = vrot.slane %v2040, 1
    %v2042 = vadd.f32 %v2040, %v2041
    %v2043 = vsel %vm945, %v2034, %v2042
    %2044 = vmatprep.subr.mxu0 0.0
    %2045 = vmatpush1.msra.mxu0 %v2010
    %2046 = vmatprep.subr.mxu0 0.0
    %2047 = vmatpush1.msra.mxu0 %v2009
    %2048 = vmatprep.subr.mxu0 0.0
    %2049 = vmatpush1.msra.mxu0 %v2008
    %2050 = vmatprep.subr.mxu0 0.0
    %2051 = vmatpush1.msra.mxu0 %v2007
    %2052 = vmatprep.subr.mxu0 0.0
    %2053 = vmatpush1.msra.mxu0 %v2006
    %2054 = vmatprep.subr.mxu0 0.0
    %2055 = vmatpush1.msra.mxu0 %v2005
    %2056 = vmatprep.subr.mxu0 0.0
    %2057 = vmatpush1.msra.mxu0 %v2004
    %2058 = vmatprep.subr.mxu0 0.0
    %2059 = vmatpush1.msra.mxu0 %v2003
    %2060 = vmatprep.subr.mxu0 0.0
    %2061 = vmatpush1.msra.mxu0 %v2002
    %2062 = vmatprep.subr.mxu0 0.0
    %2063 = vmatpush1.msra.mxu0 %v2001
    %2064 = vmatprep.subr.mxu0 0.0
    %2065 = vmatpush1.msra.mxu0 %v2000
    %2066 = vmatprep.subr.mxu0 0.0
    %2067 = vmatpush1.msra.mxu0 %v1999
    %2068 = vmatprep.subr.mxu0 0.0
    %2069 = vmatpush1.msra.mxu0 %v1998
    %2070 = vmatprep.subr.mxu0 0.0
    %2071 = vmatpush1.msra.mxu0 %v1997
    %2072 = vmatprep.subr.mxu0 0.0
    %2073 = vmatpush1.msra.mxu0 %v1996
    %2074 = vmatprep.subr.mxu0 0.0
    %2075 = vmatpush1.msra.mxu0 %v1995
    %2076 = vmatprep.subr.mxu0 0.0
    %2077 = vmatpush2.msra.mxu0 0.0
    %2078 = vmatprep.subr.mxu0 0.0
    %2079 = vmatpush2.msra.mxu0 0.0
    %2080 = vmatprep.subr.mxu0 0.0
    %2081 = vmatpush2.msra.mxu0 0.0
    %2082 = vmatprep.subr.mxu0 0.0
    %2083 = vmatpush2.msra.mxu0 0.0
    %2084 = vmatprep.subr.mxu0 0.0
    %2085 = vmatpush2.msra.mxu0 0.0
    %2086 = vmatprep.subr.mxu0 0.0
    %2087 = vmatpush2.msra.mxu0 0.0
    %2088 = vmatprep.subr.mxu0 0.0
    %2089 = vmatpush2.msra.mxu0 0.0
    %2090 = vmatprep.subr.mxu0 0.0
    %2091 = vmatpush2.msra.mxu0 0.0
    %2092 = vmatprep.subr.mxu0 0.0
    %2093 = vmatpush2.msra.mxu0 0.0
    %2094 = vmatprep.subr.mxu0 0.0
    %2095 = vmatpush2.msra.mxu0 0.0
    %2096 = vmatprep.subr.mxu0 0.0
    %2097 = vmatpush2.msra.mxu0 0.0
    %2098 = vmatprep.subr.mxu0 0.0
    %2099 = vmatpush2.msra.mxu0 0.0
    %2100 = vmatprep.subr.mxu0 0.0
    %2101 = vmatpush2.msra.mxu0 0.0
    %2102 = vmatprep.subr.mxu0 0.0
    %2103 = vmatpush2.msra.mxu0 0.0
    %2104 = vmatprep.subr.mxu0 0.0
    %2105 = vmatpush2.msra.mxu0 0.0
    %2106 = vmatprep.subr.mxu0 0.0
    %2107 = vmatpush2.msra.mxu0 0.0
    %2108 = vmatprep.mubr.f32.mxu0 0.0
    %2109 = vmatmul.mubr.f32.gmra.mxu0 %v2043
    %v2110 = vpop.f32.mrf.mxu0
    %v2111 = vadd.f32 0.0, %v2110
    %v2112 = vpop.f32.mrf.mxu0
    %2113 = vdwg.mxu0
    %v2114 = vmul.f32 %v2111, 0.5
    %v2115 = vmul.f32 %v2114, %v2114
    %v2117 = vrot.slane %v2115, 7
    %v2119 = vsub.f32 %v2114, %v2117
    %v2120 = vadd.f32 %v2119, 1e-05
    %v2121 = vrsqrt.pop %v2120
    %s2122 = scalar_lea.vmem %s3, 288
    %v2123 = vld [vmem:[%s2122] sm:$0xff]
    %v2125 = vrot.slane %v2121, 1
    %v2127 = vmul.f32 %v2123, %v2125
    %v2128 = vmul.f32 %v2114, %v2127
    %v2130 = vrot.slane %v2128, 7
    %v2132 = vsub.f32 %v2123, %v2130
    %v2133 = vsel %vm945, %v2127, %v2132
    %2134 = vmatprep.subr.mxu0 0.0
    %2135 = vmatpush1.msra.mxu0 %v2027
    %2136 = vmatprep.subr.mxu0 0.0
    %2137 = vmatpush1.msra.mxu0 %v2026
    %2138 = vmatprep.subr.mxu0 0.0
    %2139 = vmatpush1.msra.mxu0 %v2025
    %2140 = vmatprep.subr.mxu0 0.0
    %2141 = vmatpush1.msra.mxu0 %v2024
    %2142 = vmatprep.subr.mxu0 0.0
    %2143 = vmatpush1.msra.mxu0 %v2023
    %2144 = vmatprep.subr.mxu0 0.0
    %2145 = vmatpush1.msra.mxu0 %v2022
    %2146 = vmatprep.subr.mxu0 0.0
    %2147 = vmatpush1.msra.mxu0 %v2021
    %2148 = vmatprep.subr.mxu0 0.0
    %2149 = vmatpush1.msra.mxu0 %v2020
    %2150 = vmatprep.subr.mxu0 0.0
    %2151 = vmatpush1.msra.mxu0 %v2019
    %2152 = vmatprep.subr.mxu0 0.0
    %2153 = vmatpush1.msra.mxu0 %v2018
    %2154 = vmatprep.subr.mxu0 0.0
    %2155 = vmatpush1.msra.mxu0 %v2017
    %2156 = vmatprep.subr.mxu0 0.0
    %2157 = vmatpush1.msra.mxu0 %v2016
    %2158 = vmatprep.subr.mxu0 0.0
    %2159 = vmatpush1.msra.mxu0 %v2015
    %2160 = vmatprep.subr.mxu0 0.0
    %2161 = vmatpush1.msra.mxu0 %v2014
    %2162 = vmatprep.subr.mxu0 0.0
    %2163 = vmatpush1.msra.mxu0 %v2013
    %2164 = vmatprep.subr.mxu0 0.0
    %2165 = vmatpush1.msra.mxu0 %v2012
    %2166 = vmatprep.subr.mxu0 0.0
    %2167 = vmatpush2.msra.mxu0 0.0
    %2168 = vmatprep.subr.mxu0 0.0
    %2169 = vmatpush2.msra.mxu0 0.0
    %2170 = vmatprep.subr.mxu0 0.0
    %2171 = vmatpush2.msra.mxu0 0.0
    %2172 = vmatprep.subr.mxu0 0.0
    %2173 = vmatpush2.msra.mxu0 0.0
    %2174 = vmatprep.subr.mxu0 0.0
    %2175 = vmatpush2.msra.mxu0 0.0
    %2176 = vmatprep.subr.mxu0 0.0
    %2177 = vmatpush2.msra.mxu0 0.0
    %2178 = vmatprep.subr.mxu0 0.0
    %2179 = vmatpush2.msra.mxu0 0.0
    %2180 = vmatprep.subr.mxu0 0.0
    %2181 = vmatpush2.msra.mxu0 0.0
    %2182 = vmatprep.subr.mxu0 0.0
    %2183 = vmatpush2.msra.mxu0 0.0
    %2184 = vmatprep.subr.mxu0 0.0
    %2185 = vmatpush2.msra.mxu0 0.0
    %2186 = vmatprep.subr.mxu0 0.0
    %2187 = vmatpush2.msra.mxu0 0.0
    %2188 = vmatprep.subr.mxu0 0.0
    %2189 = vmatpush2.msra.mxu0 0.0
    %2190 = vmatprep.subr.mxu0 0.0
    %2191 = vmatpush2.msra.mxu0 0.0
    %2192 = vmatprep.subr.mxu0 0.0
    %2193 = vmatpush2.msra.mxu0 0.0
    %2194 = vmatprep.subr.mxu0 0.0
    %2195 = vmatpush2.msra.mxu0 0.0
    %2196 = vmatprep.subr.mxu0 0.0
    %2197 = vmatpush2.msra.mxu0 0.0
    %2198 = vmatprep.mubr.f32.mxu0 0.0
    %2199 = vmatmul.mubr.f32.gmra.mxu0 %v2133
    %v2200 = vpop.f32.mrf.mxu0
    %v2201 = vadd.f32 0.0, %v2200
    %v2202 = vpop.f32.mrf.mxu0
    %2203 = vdwg.mxu0
    %v2204 = vlaneseq
    %v2205 = vshrl.u32 %v2204, 7
    %v2206 = vsub.s32 0, %v2205
    %v2207 = vrot.slane %v2201, %v2206
    %v2208 = vmul.f32 %v1993, %v2207
    %v2209 = vlaneseq
    %v2210 = vshrl.u32 %v2209, 7
    %v2211 = vsub.s32 1, %v2210
    %v2212 = vrot.slane %v2201, %v2211
    %v2213 = vadd.f32 %v2208, %v2212
    %vm2214 = vcmp.ge.f32.partialorder %v2213, 0.0
    %v2215 = vmul.f32 %v2213, 0.2
    %v2216 = vsel %vm2214, %v2213, %v2215
    %s2217 = scalar_lea.vmem %s3, 168
    %v2218 = vld [vmem:[%s2217] sm:$0xff]
    %v2219 = vmul.f32 %v2216, %v2218
    %s2220 = scalar_lea.vmem %s1, 1024
    %v2221 = vld [vmem:[%s2220] sm:$0xff]
    %v2222 = vld [vmem:[%s2220 + $0x10] sm:$0xff]
    %v2223 = vld [vmem:[%s2220 + $0x20] sm:$0xff]
    %v2224 = vld [vmem:[%s2220 + $0x30] sm:$0xff]
    %v2225 = vld [vmem:[%s2220 + $0x40] sm:$0xff]
    %v2226 = vld [vmem:[%s2220 + $0x50] sm:$0xff]
    %v2227 = vld [vmem:[%s2220 + $0x60] sm:$0xff]
    %v2228 = vld [vmem:[%s2220 + $0x70] sm:$0xff]
    %v2229 = vld [vmem:[%s2220 + $0x80] sm:$0xff]
    %v2230 = vld [vmem:[%s2220 + $0x90] sm:$0xff]
    %v2231 = vld [vmem:[%s2220 + $0xa0] sm:$0xff]
    %v2232 = vld [vmem:[%s2220 + $0xb0] sm:$0xff]
    %v2233 = vld [vmem:[%s2220 + $0xc0] sm:$0xff]
    %v2234 = vld [vmem:[%s2220 + $0xd0] sm:$0xff]
    %v2235 = vld [vmem:[%s2220 + $0xe0] sm:$0xff]
    %v2236 = vld [vmem:[%s2220 + $0xf0] sm:$0xff]
    %s2237 = scalar_lea.vmem %s3, 192
    %v2238 = vld [vmem:[%s2237] sm:$0xff]
    %s2239 = scalar_lea.vmem %s3, 216
    %v2240 = vld [vmem:[%s2239] sm:$0xff]
    %v2241 = vpack.c.bf16 %v2219, %v2219
    %v2242 = vlaneseq
    %v2243 = vshrl.u32 %v2242, 7
    %v2244 = vsub.s32 0, %v2243
    %v2245 = vrot.slane %v2238, %v2244
    %v2262 = vunpack.c.l.b16 %v2221
    %v2263 = vunpack.c.l.b16 %v2222
    %v2264 = vunpack.c.l.b16 %v2223
    %v2265 = vunpack.c.l.b16 %v2224
    %v2266 = vunpack.c.l.b16 %v2225
    %v2267 = vunpack.c.l.b16 %v2226
    %v2268 = vunpack.c.l.b16 %v2227
    %v2269 = vunpack.c.l.b16 %v2228
    %v2270 = vunpack.c.l.b16 %v2229
    %v2271 = vunpack.c.l.b16 %v2230
    %v2272 = vunpack.c.l.b16 %v2231
    %v2273 = vunpack.c.l.b16 %v2232
    %v2274 = vunpack.c.l.b16 %v2233
    %v2275 = vunpack.c.l.b16 %v2234
    %v2276 = vunpack.c.l.b16 %v2235
    %v2277 = vunpack.c.l.b16 %v2236
    %v2278 = vpack.c.b16 %v2263, %v2262
    %v2279 = vpack.c.b16 %v2265, %v2264
    %v2280 = vpack.c.b16 %v2267, %v2266
    %v2281 = vpack.c.b16 %v2269, %v2268
    %v2282 = vpack.c.b16 %v2271, %v2270
    %v2283 = vpack.c.b16 %v2273, %v2272
    %v2284 = vpack.c.b16 %v2275, %v2274
    %v2285 = vpack.c.b16 %v2277, %v2276
    %2294 = vmatprep.subr.bf16.mxu0 0
    %2295 = vmatpush1.bf16.msra.mxu0 %v2285
    %2296 = vmatprep.subr.bf16.mxu0 0
    %2297 = vmatpush1.bf16.msra.mxu0 %v2284
    %2298 = vmatprep.subr.bf16.mxu0 0
    %2299 = vmatpush1.bf16.msra.mxu0 %v2283
    %2300 = vmatprep.subr.bf16.mxu0 0
    %2301 = vmatpush1.bf16.msra.mxu0 %v2282
    %2302 = vmatprep.subr.bf16.mxu0 0
    %2303 = vmatpush1.bf16.msra.mxu0 %v2281
    %2304 = vmatprep.subr.bf16.mxu0 0
    %2305 = vmatpush1.bf16.msra.mxu0 %v2280
    %2306 = vmatprep.subr.bf16.mxu0 0
    %2307 = vmatpush1.bf16.msra.mxu0 %v2279
    %2308 = vmatprep.subr.bf16.mxu0 0
    %2309 = vmatpush1.bf16.msra.mxu0 %v2278
    %2310 = vmatprep.subr.bf16.mxu0 0
    %2311 = vmatpush2.bf16.msra.mxu0 0
    %2312 = vmatprep.subr.bf16.mxu0 0
    %2313 = vmatpush2.bf16.msra.mxu0 0
    %2314 = vmatprep.subr.bf16.mxu0 0
    %2315 = vmatpush2.bf16.msra.mxu0 0
    %2316 = vmatprep.subr.bf16.mxu0 0
    %2317 = vmatpush2.bf16.msra.mxu0 0
    %2318 = vmatprep.subr.bf16.mxu0 0
    %2319 = vmatpush2.bf16.msra.mxu0 0
    %2320 = vmatprep.subr.bf16.mxu0 0
    %2321 = vmatpush2.bf16.msra.mxu0 0
    %2322 = vmatprep.subr.bf16.mxu0 0
    %2323 = vmatpush2.bf16.msra.mxu0 0
    %2324 = vmatprep.subr.bf16.mxu0 0
    %2325 = vmatpush2.bf16.msra.mxu0 0
    %2326 = vmatprep.mubr.bf16.mxu0 0
    %2327 = vmatmul.mubr.bf16.gmra.mxu0 %v2241
    %v2328 = vpop.f32.mrf.mxu0
    %v2329 = vadd.f32 %v2245, %v2328
    %v2330 = vpop.f32.mrf.mxu0
    %v2331 = vpop.f32.mrf.mxu0
    %v2332 = vpop.f32.mrf.mxu0
    %2333 = vdwg.mxu0
    %vm2334 = vcmp.ge.f32.partialorder %v2329, 0.0
    %v2335 = vmul.f32 %v2329, 0.2
    %v2336 = vsel %vm2334, %v2329, %v2335
    %v2337 = vpack.c.bf16 %v2336, %v2336
    %v2338 = vlaneseq
    %v2339 = vshrl.u32 %v2338, 7
    %v2340 = vsub.s32 0, %v2339
    %v2341 = vrot.slane %v2240, %v2340
    %v2342 = vunpack.c.h.b16 %v2221
    %v2343 = vunpack.c.h.b16 %v2222
    %v2344 = vunpack.c.h.b16 %v2223
    %v2345 = vunpack.c.h.b16 %v2224
    %v2346 = vunpack.c.h.b16 %v2225
    %v2347 = vunpack.c.h.b16 %v2226
    %v2348 = vunpack.c.h.b16 %v2227
    %v2349 = vunpack.c.h.b16 %v2228
    %v2350 = vunpack.c.h.b16 %v2229
    %v2351 = vunpack.c.h.b16 %v2230
    %v2352 = vunpack.c.h.b16 %v2231
    %v2353 = vunpack.c.h.b16 %v2232
    %v2354 = vunpack.c.h.b16 %v2233
    %v2355 = vunpack.c.h.b16 %v2234
    %v2356 = vunpack.c.h.b16 %v2235
    %v2357 = vunpack.c.h.b16 %v2236
    %v2358 = vpack.c.b16 %v2343, %v2342
    %v2359 = vpack.c.b16 %v2345, %v2344
    %v2360 = vpack.c.b16 %v2347, %v2346
    %v2361 = vpack.c.b16 %v2349, %v2348
    %v2362 = vpack.c.b16 %v2351, %v2350
    %v2363 = vpack.c.b16 %v2353, %v2352
    %v2364 = vpack.c.b16 %v2355, %v2354
    %v2365 = vpack.c.b16 %v2357, %v2356
    %2374 = vmatprep.subr.bf16.mxu0 0
    %2375 = vmatpush1.bf16.msra.mxu0 %v2365
    %2376 = vmatprep.subr.bf16.mxu0 0
    %2377 = vmatpush1.bf16.msra.mxu0 %v2364
    %2378 = vmatprep.subr.bf16.mxu0 0
    %2379 = vmatpush1.bf16.msra.mxu0 %v2363
    %2380 = vmatprep.subr.bf16.mxu0 0
    %2381 = vmatpush1.bf16.msra.mxu0 %v2362
    %2382 = vmatprep.subr.bf16.mxu0 0
    %2383 = vmatpush1.bf16.msra.mxu0 %v2361
    %2384 = vmatprep.subr.bf16.mxu0 0
    %2385 = vmatpush1.bf16.msra.mxu0 %v2360
    %2386 = vmatprep.subr.bf16.mxu0 0
    %2387 = vmatpush1.bf16.msra.mxu0 %v2359
    %2388 = vmatprep.subr.bf16.mxu0 0
    %2389 = vmatpush1.bf16.msra.mxu0 %v2358
    %2390 = vmatprep.subr.bf16.mxu0 0
    %2391 = vmatpush2.bf16.msra.mxu0 0
    %2392 = vmatprep.subr.bf16.mxu0 0
    %2393 = vmatpush2.bf16.msra.mxu0 0
    %2394 = vmatprep.subr.bf16.mxu0 0
    %2395 = vmatpush2.bf16.msra.mxu0 0
    %2396 = vmatprep.subr.bf16.mxu0 0
    %2397 = vmatpush2.bf16.msra.mxu0 0
    %2398 = vmatprep.subr.bf16.mxu0 0
    %2399 = vmatpush2.bf16.msra.mxu0 0
    %2400 = vmatprep.subr.bf16.mxu0 0
    %2401 = vmatpush2.bf16.msra.mxu0 0
    %2402 = vmatprep.subr.bf16.mxu0 0
    %2403 = vmatpush2.bf16.msra.mxu0 0
    %2404 = vmatprep.subr.bf16.mxu0 0
    %2405 = vmatpush2.bf16.msra.mxu0 0
    %2406 = vmatprep.mubr.bf16.mxu0 0
    %2407 = vmatmul.mubr.bf16.gmra.mxu0 %v2337
    %v2408 = vpop.f32.mrf.mxu0
    %v2409 = vadd.f32 %v2341, %v2408
    %v2410 = vpop.f32.mrf.mxu0
    %v2411 = vpop.f32.mrf.mxu0
    %v2412 = vpop.f32.mrf.mxu0
    %2413 = vdwg.mxu0
    %vm2414 = vcmask 25600
    %2415 = vst.msk [vmem:[#allocation5] sm:$0x3] %vm2414, %v2409
    // Predicated region
    $region26: #{forward.1} parent=1 // pred_check
      _
    $region27: #{forward.1} parent=1 // pred_check_branch
      %2417 = sbr.rel (0) target = $region29
    $region28: #{forward.1} parent=1 // pred_region
      %s2419 = ssub.s32 32, 32
      %2420 = vsyncadd [#allocation4], %s2419
      %s2422 = sshll.u32 [#allocation5], 4
      %s2423 = int_to_ptr.vmem [resolvable:$true] %s2422
      %2425 = dma.vmem_to_hbm [thread:$0]  %s2423, 32, %s5, [#allocation4]
    $region29: #{forward.1} parent=1 // pred_fallthru
      _
    // Predicated region
    $region30: #{forward.1} parent=1 // pred_check
      _
    $region31: #{forward.1} parent=1 // pred_check_branch
      %2427 = sbr.rel (0) target = $region33
    $region32: #{forward.1} parent=1 // pred_region
      %2428 = dma.done [#allocation4], 32
    $region33: #{forward.1} parent=1 // pred_fallthru
      _
    %2429 = vsyncpa [#allocation3], 1
    %2430 = vsyncpa [#allocation4], 1

</llo_original>
